<compile_context>
chip_gen: v6e
topology: v6e:2x2x1
jax: 0.10.0
libtpu: 0.0.40
codegen_flags: <defaults>
</compile_context>

<pallas_src>
import functools

import jax
import jax.numpy as jnp
from jax.experimental import pallas as pl
from jax.experimental.pallas import tpu as pltpu


def _spatial_attention_kernel(x_ref, wqk_ref, rd_ref, u_ref, v_ref, w_ref,
                              b_ref, out_ref, *, d_in, Nh):
    # Per-t block views (leading T dim squeezed away by the BlockSpecs):
    #   x_ref:   (bs, F, d_in)        X[:, t]          (wrapper layout (T,bs,F,d_in))
    #   wqk_ref: (d_in, F, 4*Nh)      [W_query | W_key][t], he = h*2 + e fast
    #   rd_ref:  (2, F, F)            r_delta[t, :, :, e] per e-component
    #   u_ref:   (2, F)               u[t].T  (e, l) -- lane-ready, no relayout
    #   v_ref:   (Nh, 2)              v[t] = -alpha[t] * [1, -2*center]
    #   w_ref:   (d_in, Nh*d_out)     W[t] regrouped as (d, h*d_out + o)
    #   b_ref:   (F, d_out)           b[:, t, :]
    #   out_ref: (bs, F, d_out)
    X = x_ref[...].astype(jnp.float32)                      # (bs, F, d_in)
    bs, F_, _ = X.shape
    d_out = out_ref.shape[-1]

    # One shared MAC loop over d (VPU broadcast-FMAs):
    #   qk[b,f,he]        = sum_d X[b,f,d] * Wqk[d,f,he]
    #   xw[b,l,h*do + o]  = sum_d X[b,l,d] * W[d, h*do + o]
    qk = jnp.zeros((bs, F_, 4 * Nh), jnp.float32)
    xw = jnp.zeros((bs, F_, Nh * d_out), jnp.float32)
    for d in range(d_in):
        xd = X[:, :, d:d + 1]                               # (bs, F, 1)
        qk = qk + xd * wqk_ref[d][None]                     # (1, F, 4*Nh)
        xw = xw + xd * w_ref[d:d + 1, :][None]              # (1, 1, Nh*d_out)
    query = qk[:, :, :2 * Nh]                               # (bs, F, 2*Nh)
    key = qk[:, :, 2 * Nh:]                                 # (bs, F, 2*Nh)

    rd0 = rd_ref[0][None]                                   # (1, F, F)
    rd1 = rd_ref[1][None]
    u0 = u_ref[0:1, :][None]                                # (1, 1, F)
    u1 = u_ref[1:2, :][None]
    V = v_ref[...]                                          # (Nh, 2)

    acc = jnp.zeros((bs, F_, d_out), jnp.float32)
    for h in range(Nh):
        q0 = query[:, :, 2 * h:2 * h + 1]                   # (bs, F, 1)
        q1 = query[:, :, 2 * h + 1:2 * h + 2]
        k0 = key[:, :, 2 * h:2 * h + 1]
        k1 = key[:, :, 2 * h + 1:2 * h + 2]
        k0l = jnp.reshape(k0, (bs, 1, F_))                  # (bs, 1, F)
        k1l = jnp.reshape(k1, (bs, 1, F_))

        v0 = V[h:h + 1, 0:1]                                # (1, 1)
        v1 = V[h:h + 1, 1:2]

        # first            : sum_e q[f,e] * k[l,e]              (VPU outer products)
        # second + fourth  : sum_e (q[f,e] + v[h,e]) * r_delta[f,l,e]
        # third            : sum_e u[l,e] * k[f,e]
        scores = (q0 * k0l + q1 * k1l
                  + (q0 + v0) * rd0 + (q1 + v1) * rd1
                  + k0 * u0 + k1 * u1)                       # (bs, F, F)

        # softmax over l (exact division to stay well inside tolerance)
        m = jnp.max(scores, axis=-1, keepdims=True)
        e = jnp.exp(scores - m)
        probs = e / jnp.sum(e, axis=-1, keepdims=True)       # (bs, F, F)

        # acc[b,f,o] += sum_l probs[b,f,l] * (X @ W_h)[b,l,o]   (K = F matmul)
        xw_h = xw[:, :, h * d_out:(h + 1) * d_out]           # (bs, F, d_out)
        acc = acc + jnp.einsum("bfl,blo->bfo", probs, xw_h,
                               preferred_element_type=jnp.float32)

    out_ref[...] = acc + b_ref[...][None]                    # + bias[f, o]


def spatial_attention_forward(X, params):
    bs, F_, T, d_in = X.shape
    Nh = params["W_query"].shape[3]
    d_out = params["W"].shape[-1]

    # ---- glue (plain JAX): layout permutes + parameter-only precomputation ----
    Xp = jnp.transpose(X, (2, 0, 1, 3)).astype(jnp.float32)            # (T, bs, F, d_in)

    # (T,F,d_in,Nh,2) -> (T,d_in,F,Nh*2); concat query|key weights on lanes
    Wq = jnp.transpose(params["W_query"], (0, 2, 1, 3, 4)).reshape(T, d_in, F_, Nh * 2)
    Wk = jnp.transpose(params["W_key"], (0, 2, 1, 3, 4)).reshape(T, d_in, F_, Nh * 2)
    Wqk = jnp.concatenate([Wq, Wk], axis=-1).astype(jnp.float32)       # (T, d_in, F, 4*Nh)

    r_delta = jnp.einsum("tde,tfle->tfld", params["Wkey_"], params["R"])   # (T,F,F,2)
    rd = jnp.transpose(r_delta, (0, 3, 1, 2)).astype(jnp.float32)          # (T,2,F,F)

    uT = jnp.transpose(params["u"], (0, 2, 1)).astype(jnp.float32)         # (T,2,F)

    centers = jnp.concatenate(
        [jnp.ones_like(params["attention_center"]),
         -2.0 * params["attention_center"]], axis=-1)                      # (T,Nh,2)
    v = (-params["alpha"][:, None, None] * centers).astype(jnp.float32)    # (T,Nh,2)

    # (T, Nh*d_in, d_out) -> (T, d_in, Nh*d_out): all heads' value weights on lanes
    W_all = jnp.transpose(
        params["W"].reshape(T, Nh, d_in, d_out), (0, 2, 1, 3)
    ).reshape(T, d_in, Nh * d_out).astype(jnp.float32)

    bias = jnp.transpose(params["b"], (1, 0, 2)).astype(jnp.float32)       # (T,F,d_out)

    kern = functools.partial(_spatial_attention_kernel, d_in=d_in, Nh=Nh)

    out_tbf = pl.pallas_call(
        kern,
        grid=(T,),
        in_specs=[
            pl.BlockSpec((None, bs, F_, d_in), lambda t: (t, 0, 0, 0)),       # X
            pl.BlockSpec((None, d_in, F_, 4 * Nh), lambda t: (t, 0, 0, 0)),   # Wqk
            pl.BlockSpec((None, 2, F_, F_), lambda t: (t, 0, 0, 0)),          # r_delta
            pl.BlockSpec((None, 2, F_), lambda t: (t, 0, 0)),                 # u (transposed)
            pl.BlockSpec((None, Nh, 2), lambda t: (t, 0, 0)),                 # v
            pl.BlockSpec((None, d_in, Nh * d_out), lambda t: (t, 0, 0)),      # W (all heads)
            pl.BlockSpec((None, F_, d_out), lambda t: (t, 0, 0)),             # bias
        ],
        out_specs=pl.BlockSpec((None, bs, F_, d_out), lambda t: (t, 0, 0, 0)),
        out_shape=jax.ShapeDtypeStruct((T, bs, F_, d_out), jnp.float32),
        compiler_params=pltpu.CompilerParams(
            dimension_semantics=("parallel",)),
    )(Xp, Wqk, rd, uT, v, W_all, bias)

    # (T, bs, F, d_out) -> (bs, F, T, d_out)   (matches PyTorch forward output)
    return jnp.transpose(out_tbf, (1, 2, 0, 3))


def reference_forward(X, p):
    """Pure-JAX transcription of the PyTorch forward, for validation."""
    Xp = jnp.transpose(X, (0, 2, 1, 3)).astype(jnp.float32)
    query = jnp.einsum("btfd,tfdhe->btfhe", Xp, p["W_query"])
    key = jnp.einsum("btfd,tfdhe->btfhe", Xp, p["W_key"])
    r_delta = jnp.einsum("tde,tfle->tfld", p["Wkey_"], p["R"])
    centers = jnp.concatenate([jnp.ones_like(p["attention_center"]),
                               -2.0 * p["attention_center"]], axis=-1)
    v = jnp.einsum("t,tde->tde", -p["alpha"], centers)
    first = jnp.einsum("btfhe,btlhe->btfhl", query, key)
    second = jnp.einsum("btfhe,tfle->btfhl", query, r_delta)
    third = jnp.einsum("tle,btfhe->btfhl", p["u"], key)
    fourth = jnp.einsum("the,tfle->tfhl", v, r_delta)
    scores = first + second + third + fourth[None]
    probs = jax.nn.softmax(scores, axis=-1)
    iv = jnp.einsum("btfhl,btld->btfhd", probs, Xp)
    bs, T, F_, Nh, d_in = iv.shape
    iv = iv.reshape(bs, T, F_, Nh * d_in)
    return jnp.einsum("btfd,tdo->bfto", iv, p["W"]) + p["b"]


if __name__ == "__main__":
    # small shapes consistent with forward(): X is (bs, F, T, d_in)
    bs, T, F_, d_in, Nh, d_out = 2, 4, 16, 4, 2, 8
    gaussian_init_delta_std = 2.0

    key = jax.random.PRNGKey(0)
    ks = jax.random.split(key, 9)

    rel = jnp.arange(F_)[None, :] - jnp.arange(F_)[:, None]
    R_single = jnp.stack([rel ** 2, rel], axis=-1).astype(jnp.float32)      # (F,F,2)

    params = {
        "attention_center": gaussian_init_delta_std
        * jax.random.normal(ks[0], (T, Nh, 1), jnp.float32),
        "alpha": jax.random.normal(ks[1], (T,), jnp.float32),
        "W_query": jax.random.normal(ks[2], (T, F_, d_in, Nh, 2), jnp.float32),
        "W_key": jax.random.normal(ks[3], (T, F_, d_in, Nh, 2), jnp.float32),
        "Wkey_": jax.random.normal(ks[4], (T, 2, 2), jnp.float32),
        "u": jax.random.normal(ks[5], (T, F_, 2), jnp.float32),
        "R": jnp.broadcast_to(R_single[None], (T, F_, F_, 2)),
        "W": jax.random.normal(ks[6], (T, Nh * d_in, d_out), jnp.float32),
        "b": jax.random.normal(ks[7], (F_, T, d_out), jnp.float32),
    }

    x = jax.random.normal(ks[8], (bs, F_, T, d_in), jnp.float32)

    out = spatial_attention_forward(x, params)
    out = jax.block_until_ready(out)

    ref = jax.block_until_ready(reference_forward(x, params))
    assert out.shape == (bs, F_, T, d_out)
    assert jnp.allclose(out, ref, rtol=2e-3, atol=2e-3), (
        f"max abs err {jnp.max(jnp.abs(out - ref))}")

    print("KERNEL_OK")
</pallas_src>

<mosaic_0001>
module attributes {stable_mosaic.version = 11 : i64} {
  func.func @_spatial_attention_kernel(%arg0: i32, %arg1: memref<1x2x16x4xf32, #tpu.memory_space<vmem>>, %arg2: memref<1x4x16x8xf32, #tpu.memory_space<vmem>>, %arg3: memref<1x2x16x16xf32, #tpu.memory_space<vmem>>, %arg4: memref<1x2x16xf32, #tpu.memory_space<vmem>>, %arg5: memref<1x2x2xf32, #tpu.memory_space<vmem>>, %arg6: memref<1x4x16xf32, #tpu.memory_space<vmem>>, %arg7: memref<1x16x8xf32, #tpu.memory_space<vmem>>, %arg8: memref<1x2x16x8xf32, #tpu.memory_space<vmem>>) attributes {dimension_semantics = [#tpu.dimension_semantics<parallel>], iteration_bounds = array<i64: 4>, scalar_prefetch = 0 : i64, scratch_operands = 0 : i64, tpu.core_type = #tpu.core_type<tc>, window_params = [{transform_indices = @transform_0, window_bounds = array<i64: 1, 2, 16, 4>}, {transform_indices = @transform_1, window_bounds = array<i64: 1, 4, 16, 8>}, {transform_indices = @transform_2, window_bounds = array<i64: 1, 2, 16, 16>}, {transform_indices = @transform_3, window_bounds = array<i64: 1, 2, 16>}, {transform_indices = @transform_4, window_bounds = array<i64: 1, 2, 2>}, {transform_indices = @transform_5, window_bounds = array<i64: 1, 4, 16>}, {transform_indices = @transform_6, window_bounds = array<i64: 1, 16, 8>}, {transform_indices = @transform_7, window_bounds = array<i64: 1, 2, 16, 8>}]} {
    %c0 = arith.constant 0 : index
    %c0_0 = arith.constant 0 : index
    %c0_1 = arith.constant 0 : index
    %c0_2 = arith.constant 0 : index
    %0 = vector.load %arg1[%c0, %c0_0, %c0_1, %c0_2] : memref<1x2x16x4xf32, #tpu.memory_space<vmem>>, vector<1x2x16x4xf32>
    %1 = vector.shape_cast %0 : vector<1x2x16x4xf32> to vector<2x16x4xf32>
    %cst = arith.constant 0.000000e+00 : f32
    %2 = vector.broadcast %cst : f32 to vector<2x16x8xf32>
    %cst_3 = arith.constant 0.000000e+00 : f32
    %3 = vector.broadcast %cst_3 : f32 to vector<2x16x16xf32>
    %4 = vector.extract_strided_slice %1 {offsets = [0, 0, 0], sizes = [2, 16, 1], strides = [1, 1, 1]} : vector<2x16x4xf32> to vector<2x16x1xf32>
    %c0_4 = arith.constant 0 : index
    %c0_5 = arith.constant 0 : index
    %c0_6 = arith.constant 0 : index
    %c0_7 = arith.constant 0 : index
    %5 = vector.load %arg2[%c0_4, %c0_5, %c0_6, %c0_7] : memref<1x4x16x8xf32, #tpu.memory_space<vmem>>, vector<1x1x16x8xf32>
    %6 = vector.shape_cast %5 : vector<1x1x16x8xf32> to vector<16x8xf32>
    %7 = vector.shape_cast %6 : vector<16x8xf32> to vector<1x16x8xf32>
    %8 = vector.broadcast %4 : vector<2x16x1xf32> to vector<2x16x8xf32>
    %9 = vector.broadcast %7 : vector<1x16x8xf32> to vector<2x16x8xf32>
    %10 = arith.mulf %8, %9 : vector<2x16x8xf32>
    %11 = arith.addf %2, %10 : vector<2x16x8xf32>
    %c0_8 = arith.constant 0 : index
    %c0_9 = arith.constant 0 : index
    %c0_10 = arith.constant 0 : index
    %12 = vector.load %arg6[%c0_8, %c0_9, %c0_10] : memref<1x4x16xf32, #tpu.memory_space<vmem>>, vector<1x1x16xf32>
    %13 = vector.shape_cast %12 : vector<1x1x16xf32> to vector<1x16xf32>
    %14 = vector.shape_cast %13 : vector<1x16xf32> to vector<1x1x16xf32>
    %15 = vector.broadcast %4 : vector<2x16x1xf32> to vector<2x16x16xf32>
    %16 = vector.broadcast %14 : vector<1x1x16xf32> to vector<2x16x16xf32>
    %17 = arith.mulf %15, %16 : vector<2x16x16xf32>
    %18 = arith.addf %3, %17 : vector<2x16x16xf32>
    %19 = vector.extract_strided_slice %1 {offsets = [0, 0, 1], sizes = [2, 16, 1], strides = [1, 1, 1]} : vector<2x16x4xf32> to vector<2x16x1xf32>
    %c0_11 = arith.constant 0 : index
    %c1 = arith.constant 1 : index
    %c0_12 = arith.constant 0 : index
    %c0_13 = arith.constant 0 : index
    %20 = vector.load %arg2[%c0_11, %c1, %c0_12, %c0_13] : memref<1x4x16x8xf32, #tpu.memory_space<vmem>>, vector<1x1x16x8xf32>
    %21 = vector.shape_cast %20 : vector<1x1x16x8xf32> to vector<16x8xf32>
    %22 = vector.shape_cast %21 : vector<16x8xf32> to vector<1x16x8xf32>
    %23 = vector.broadcast %19 : vector<2x16x1xf32> to vector<2x16x8xf32>
    %24 = vector.broadcast %22 : vector<1x16x8xf32> to vector<2x16x8xf32>
    %25 = arith.mulf %23, %24 : vector<2x16x8xf32>
    %26 = arith.addf %11, %25 : vector<2x16x8xf32>
    %c0_14 = arith.constant 0 : index
    %c1_15 = arith.constant 1 : index
    %c0_16 = arith.constant 0 : index
    %27 = vector.load %arg6[%c0_14, %c1_15, %c0_16] : memref<1x4x16xf32, #tpu.memory_space<vmem>>, vector<1x1x16xf32>
    %28 = vector.shape_cast %27 : vector<1x1x16xf32> to vector<1x16xf32>
    %29 = vector.shape_cast %28 : vector<1x16xf32> to vector<1x1x16xf32>
    %30 = vector.broadcast %19 : vector<2x16x1xf32> to vector<2x16x16xf32>
    %31 = vector.broadcast %29 : vector<1x1x16xf32> to vector<2x16x16xf32>
    %32 = arith.mulf %30, %31 : vector<2x16x16xf32>
    %33 = arith.addf %18, %32 : vector<2x16x16xf32>
    %34 = vector.extract_strided_slice %1 {offsets = [0, 0, 2], sizes = [2, 16, 1], strides = [1, 1, 1]} : vector<2x16x4xf32> to vector<2x16x1xf32>
    %c0_17 = arith.constant 0 : index
    %c2 = arith.constant 2 : index
    %c0_18 = arith.constant 0 : index
    %c0_19 = arith.constant 0 : index
    %35 = vector.load %arg2[%c0_17, %c2, %c0_18, %c0_19] : memref<1x4x16x8xf32, #tpu.memory_space<vmem>>, vector<1x1x16x8xf32>
    %36 = vector.shape_cast %35 : vector<1x1x16x8xf32> to vector<16x8xf32>
    %37 = vector.shape_cast %36 : vector<16x8xf32> to vector<1x16x8xf32>
    %38 = vector.broadcast %34 : vector<2x16x1xf32> to vector<2x16x8xf32>
    %39 = vector.broadcast %37 : vector<1x16x8xf32> to vector<2x16x8xf32>
    %40 = arith.mulf %38, %39 : vector<2x16x8xf32>
    %41 = arith.addf %26, %40 : vector<2x16x8xf32>
    %c0_20 = arith.constant 0 : index
    %c2_21 = arith.constant 2 : index
    %c0_22 = arith.constant 0 : index
    %42 = vector.load %arg6[%c0_20, %c2_21, %c0_22] : memref<1x4x16xf32, #tpu.memory_space<vmem>>, vector<1x1x16xf32>
    %43 = vector.shape_cast %42 : vector<1x1x16xf32> to vector<1x16xf32>
    %44 = vector.shape_cast %43 : vector<1x16xf32> to vector<1x1x16xf32>
    %45 = vector.broadcast %34 : vector<2x16x1xf32> to vector<2x16x16xf32>
    %46 = vector.broadcast %44 : vector<1x1x16xf32> to vector<2x16x16xf32>
    %47 = arith.mulf %45, %46 : vector<2x16x16xf32>
    %48 = arith.addf %33, %47 : vector<2x16x16xf32>
    %49 = vector.extract_strided_slice %1 {offsets = [0, 0, 3], sizes = [2, 16, 1], strides = [1, 1, 1]} : vector<2x16x4xf32> to vector<2x16x1xf32>
    %c0_23 = arith.constant 0 : index
    %c3 = arith.constant 3 : index
    %c0_24 = arith.constant 0 : index
    %c0_25 = arith.constant 0 : index
    %50 = vector.load %arg2[%c0_23, %c3, %c0_24, %c0_25] : memref<1x4x16x8xf32, #tpu.memory_space<vmem>>, vector<1x1x16x8xf32>
    %51 = vector.shape_cast %50 : vector<1x1x16x8xf32> to vector<16x8xf32>
    %52 = vector.shape_cast %51 : vector<16x8xf32> to vector<1x16x8xf32>
    %53 = vector.broadcast %49 : vector<2x16x1xf32> to vector<2x16x8xf32>
    %54 = vector.broadcast %52 : vector<1x16x8xf32> to vector<2x16x8xf32>
    %55 = arith.mulf %53, %54 : vector<2x16x8xf32>
    %56 = arith.addf %41, %55 : vector<2x16x8xf32>
    %c0_26 = arith.constant 0 : index
    %c3_27 = arith.constant 3 : index
    %c0_28 = arith.constant 0 : index
    %57 = vector.load %arg6[%c0_26, %c3_27, %c0_28] : memref<1x4x16xf32, #tpu.memory_space<vmem>>, vector<1x1x16xf32>
    %58 = vector.shape_cast %57 : vector<1x1x16xf32> to vector<1x16xf32>
    %59 = vector.shape_cast %58 : vector<1x16xf32> to vector<1x1x16xf32>
    %60 = vector.broadcast %49 : vector<2x16x1xf32> to vector<2x16x16xf32>
    %61 = vector.broadcast %59 : vector<1x1x16xf32> to vector<2x16x16xf32>
    %62 = arith.mulf %60, %61 : vector<2x16x16xf32>
    %63 = arith.addf %48, %62 : vector<2x16x16xf32>
    %64 = vector.extract_strided_slice %56 {offsets = [0, 0, 0], sizes = [2, 16, 4], strides = [1, 1, 1]} : vector<2x16x8xf32> to vector<2x16x4xf32>
    %65 = vector.extract_strided_slice %56 {offsets = [0, 0, 4], sizes = [2, 16, 4], strides = [1, 1, 1]} : vector<2x16x8xf32> to vector<2x16x4xf32>
    %c0_29 = arith.constant 0 : index
    %c0_30 = arith.constant 0 : index
    %c0_31 = arith.constant 0 : index
    %c0_32 = arith.constant 0 : index
    %66 = vector.load %arg3[%c0_29, %c0_30, %c0_31, %c0_32] : memref<1x2x16x16xf32, #tpu.memory_space<vmem>>, vector<1x1x16x16xf32>
    %67 = vector.shape_cast %66 : vector<1x1x16x16xf32> to vector<16x16xf32>
    %68 = vector.shape_cast %67 : vector<16x16xf32> to vector<1x16x16xf32>
    %c0_33 = arith.constant 0 : index
    %c1_34 = arith.constant 1 : index
    %c0_35 = arith.constant 0 : index
    %c0_36 = arith.constant 0 : index
    %69 = vector.load %arg3[%c0_33, %c1_34, %c0_35, %c0_36] : memref<1x2x16x16xf32, #tpu.memory_space<vmem>>, vector<1x1x16x16xf32>
    %70 = vector.shape_cast %69 : vector<1x1x16x16xf32> to vector<16x16xf32>
    %71 = vector.shape_cast %70 : vector<16x16xf32> to vector<1x16x16xf32>
    %c0_37 = arith.constant 0 : index
    %c0_38 = arith.constant 0 : index
    %c0_39 = arith.constant 0 : index
    %72 = vector.load %arg4[%c0_37, %c0_38, %c0_39] : memref<1x2x16xf32, #tpu.memory_space<vmem>>, vector<1x1x16xf32>
    %73 = vector.shape_cast %72 : vector<1x1x16xf32> to vector<1x16xf32>
    %74 = vector.shape_cast %73 : vector<1x16xf32> to vector<1x1x16xf32>
    %c0_40 = arith.constant 0 : index
    %c1_41 = arith.constant 1 : index
    %c0_42 = arith.constant 0 : index
    %75 = vector.load %arg4[%c0_40, %c1_41, %c0_42] : memref<1x2x16xf32, #tpu.memory_space<vmem>>, vector<1x1x16xf32>
    %76 = vector.shape_cast %75 : vector<1x1x16xf32> to vector<1x16xf32>
    %77 = vector.shape_cast %76 : vector<1x16xf32> to vector<1x1x16xf32>
    %c0_43 = arith.constant 0 : index
    %c0_44 = arith.constant 0 : index
    %c0_45 = arith.constant 0 : index
    %78 = vector.load %arg5[%c0_43, %c0_44, %c0_45] : memref<1x2x2xf32, #tpu.memory_space<vmem>>, vector<1x2x2xf32>
    %79 = vector.shape_cast %78 : vector<1x2x2xf32> to vector<2x2xf32>
    %cst_46 = arith.constant 0.000000e+00 : f32
    %80 = vector.broadcast %cst_46 : f32 to vector<2x16x8xf32>
    %81 = vector.extract_strided_slice %64 {offsets = [0, 0, 0], sizes = [2, 16, 1], strides = [1, 1, 1]} : vector<2x16x4xf32> to vector<2x16x1xf32>
    %82 = vector.extract_strided_slice %64 {offsets = [0, 0, 1], sizes = [2, 16, 1], strides = [1, 1, 1]} : vector<2x16x4xf32> to vector<2x16x1xf32>
    %83 = vector.extract_strided_slice %65 {offsets = [0, 0, 0], sizes = [2, 16, 1], strides = [1, 1, 1]} : vector<2x16x4xf32> to vector<2x16x1xf32>
    %84 = vector.extract_strided_slice %65 {offsets = [0, 0, 1], sizes = [2, 16, 1], strides = [1, 1, 1]} : vector<2x16x4xf32> to vector<2x16x1xf32>
    %85 = vector.shape_cast %83 : vector<2x16x1xf32> to vector<2x1x16xf32>
    %86 = vector.shape_cast %84 : vector<2x16x1xf32> to vector<2x1x16xf32>
    %87 = vector.extract_strided_slice %79 {offsets = [0, 0], sizes = [1, 1], strides = [1, 1]} : vector<2x2xf32> to vector<1x1xf32>
    %88 = vector.extract_strided_slice %79 {offsets = [0, 1], sizes = [1, 1], strides = [1, 1]} : vector<2x2xf32> to vector<1x1xf32>
    %89 = vector.broadcast %81 : vector<2x16x1xf32> to vector<2x16x16xf32>
    %90 = vector.broadcast %85 : vector<2x1x16xf32> to vector<2x16x16xf32>
    %91 = arith.mulf %89, %90 : vector<2x16x16xf32>
    %92 = vector.broadcast %82 : vector<2x16x1xf32> to vector<2x16x16xf32>
    %93 = vector.broadcast %86 : vector<2x1x16xf32> to vector<2x16x16xf32>
    %94 = arith.mulf %92, %93 : vector<2x16x16xf32>
    %95 = arith.addf %91, %94 : vector<2x16x16xf32>
    %96 = vector.shape_cast %87 : vector<1x1xf32> to vector<1x1x1xf32>
    %97 = vector.broadcast %96 : vector<1x1x1xf32> to vector<2x16x1xf32>
    %98 = arith.addf %81, %97 : vector<2x16x1xf32>
    %99 = vector.broadcast %98 : vector<2x16x1xf32> to vector<2x16x16xf32>
    %100 = vector.broadcast %68 : vector<1x16x16xf32> to vector<2x16x16xf32>
    %101 = arith.mulf %99, %100 : vector<2x16x16xf32>
    %102 = arith.addf %95, %101 : vector<2x16x16xf32>
    %103 = vector.shape_cast %88 : vector<1x1xf32> to vector<1x1x1xf32>
    %104 = vector.broadcast %103 : vector<1x1x1xf32> to vector<2x16x1xf32>
    %105 = arith.addf %82, %104 : vector<2x16x1xf32>
    %106 = vector.broadcast %105 : vector<2x16x1xf32> to vector<2x16x16xf32>
    %107 = vector.broadcast %71 : vector<1x16x16xf32> to vector<2x16x16xf32>
    %108 = arith.mulf %106, %107 : vector<2x16x16xf32>
    %109 = arith.addf %102, %108 : vector<2x16x16xf32>
    %110 = vector.broadcast %83 : vector<2x16x1xf32> to vector<2x16x16xf32>
    %111 = vector.broadcast %74 : vector<1x1x16xf32> to vector<2x16x16xf32>
    %112 = arith.mulf %110, %111 : vector<2x16x16xf32>
    %113 = arith.addf %109, %112 : vector<2x16x16xf32>
    %114 = vector.broadcast %84 : vector<2x16x1xf32> to vector<2x16x16xf32>
    %115 = vector.broadcast %77 : vector<1x1x16xf32> to vector<2x16x16xf32>
    %116 = arith.mulf %114, %115 : vector<2x16x16xf32>
    %117 = arith.addf %113, %116 : vector<2x16x16xf32>
    %cst_47 = arith.constant dense<0xFF800000> : vector<2x16xf32>
    %118 = vector.multi_reduction <maximumf>, %117, %cst_47 [2] : vector<2x16x16xf32> to vector<2x16xf32>
    %119 = vector.shape_cast %118 : vector<2x16xf32> to vector<2x16x1xf32>
    %120 = vector.broadcast %119 : vector<2x16x1xf32> to vector<2x16x16xf32>
    %121 = arith.subf %117, %120 : vector<2x16x16xf32>
    %122 = math.exp %121 : vector<2x16x16xf32>
    %cst_48 = arith.constant dense<0.000000e+00> : vector<2x16xf32>
    %123 = vector.multi_reduction <add>, %122, %cst_48 [2] : vector<2x16x16xf32> to vector<2x16xf32>
    %124 = vector.shape_cast %123 : vector<2x16xf32> to vector<2x16x1xf32>
    %125 = vector.broadcast %124 : vector<2x16x1xf32> to vector<2x16x16xf32>
    %126 = arith.divf %122, %125 : vector<2x16x16xf32>
    %127 = vector.extract_strided_slice %63 {offsets = [0, 0, 0], sizes = [2, 16, 8], strides = [1, 1, 1]} : vector<2x16x16xf32> to vector<2x16x8xf32>
    "tpu.trace_start"() <{level = 10 : i32, message = "bfl,blo->bfo"}> : () -> ()
    %cst_49 = arith.constant dense<0.000000e+00> : vector<2x16x8xf32>
    %128 = tpu.matmul %126, %127, %cst_49 {dimension_numbers = #tpu.dot_dimension_numbers<[2], [1], [1], [2], [0, 0, 0, 1, 1, 2], [0], [0]>} : vector<2x16x16xf32>, vector<2x16x8xf32>, vector<2x16x8xf32> -> vector<2x16x8xf32>
    "tpu.trace_stop"() : () -> ()
    %129 = arith.addf %80, %128 : vector<2x16x8xf32>
    %130 = vector.extract_strided_slice %64 {offsets = [0, 0, 2], sizes = [2, 16, 1], strides = [1, 1, 1]} : vector<2x16x4xf32> to vector<2x16x1xf32>
    %131 = vector.extract_strided_slice %64 {offsets = [0, 0, 3], sizes = [2, 16, 1], strides = [1, 1, 1]} : vector<2x16x4xf32> to vector<2x16x1xf32>
    %132 = vector.extract_strided_slice %65 {offsets = [0, 0, 2], sizes = [2, 16, 1], strides = [1, 1, 1]} : vector<2x16x4xf32> to vector<2x16x1xf32>
    %133 = vector.extract_strided_slice %65 {offsets = [0, 0, 3], sizes = [2, 16, 1], strides = [1, 1, 1]} : vector<2x16x4xf32> to vector<2x16x1xf32>
    %134 = vector.shape_cast %132 : vector<2x16x1xf32> to vector<2x1x16xf32>
    %135 = vector.shape_cast %133 : vector<2x16x1xf32> to vector<2x1x16xf32>
    %136 = vector.extract_strided_slice %79 {offsets = [1, 0], sizes = [1, 1], strides = [1, 1]} : vector<2x2xf32> to vector<1x1xf32>
    %137 = vector.extract_strided_slice %79 {offsets = [1, 1], sizes = [1, 1], strides = [1, 1]} : vector<2x2xf32> to vector<1x1xf32>
    %138 = vector.broadcast %130 : vector<2x16x1xf32> to vector<2x16x16xf32>
    %139 = vector.broadcast %134 : vector<2x1x16xf32> to vector<2x16x16xf32>
    %140 = arith.mulf %138, %139 : vector<2x16x16xf32>
    %141 = vector.broadcast %131 : vector<2x16x1xf32> to vector<2x16x16xf32>
    %142 = vector.broadcast %135 : vector<2x1x16xf32> to vector<2x16x16xf32>
    %143 = arith.mulf %141, %142 : vector<2x16x16xf32>
    %144 = arith.addf %140, %143 : vector<2x16x16xf32>
    %145 = vector.shape_cast %136 : vector<1x1xf32> to vector<1x1x1xf32>
    %146 = vector.broadcast %145 : vector<1x1x1xf32> to vector<2x16x1xf32>
    %147 = arith.addf %130, %146 : vector<2x16x1xf32>
    %148 = vector.broadcast %147 : vector<2x16x1xf32> to vector<2x16x16xf32>
    %149 = vector.broadcast %68 : vector<1x16x16xf32> to vector<2x16x16xf32>
    %150 = arith.mulf %148, %149 : vector<2x16x16xf32>
    %151 = arith.addf %144, %150 : vector<2x16x16xf32>
    %152 = vector.shape_cast %137 : vector<1x1xf32> to vector<1x1x1xf32>
    %153 = vector.broadcast %152 : vector<1x1x1xf32> to vector<2x16x1xf32>
    %154 = arith.addf %131, %153 : vector<2x16x1xf32>
    %155 = vector.broadcast %154 : vector<2x16x1xf32> to vector<2x16x16xf32>
    %156 = vector.broadcast %71 : vector<1x16x16xf32> to vector<2x16x16xf32>
    %157 = arith.mulf %155, %156 : vector<2x16x16xf32>
    %158 = arith.addf %151, %157 : vector<2x16x16xf32>
    %159 = vector.broadcast %132 : vector<2x16x1xf32> to vector<2x16x16xf32>
    %160 = vector.broadcast %74 : vector<1x1x16xf32> to vector<2x16x16xf32>
    %161 = arith.mulf %159, %160 : vector<2x16x16xf32>
    %162 = arith.addf %158, %161 : vector<2x16x16xf32>
    %163 = vector.broadcast %133 : vector<2x16x1xf32> to vector<2x16x16xf32>
    %164 = vector.broadcast %77 : vector<1x1x16xf32> to vector<2x16x16xf32>
    %165 = arith.mulf %163, %164 : vector<2x16x16xf32>
    %166 = arith.addf %162, %165 : vector<2x16x16xf32>
    %cst_50 = arith.constant dense<0xFF800000> : vector<2x16xf32>
    %167 = vector.multi_reduction <maximumf>, %166, %cst_50 [2] : vector<2x16x16xf32> to vector<2x16xf32>
    %168 = vector.shape_cast %167 : vector<2x16xf32> to vector<2x16x1xf32>
    %169 = vector.broadcast %168 : vector<2x16x1xf32> to vector<2x16x16xf32>
    %170 = arith.subf %166, %169 : vector<2x16x16xf32>
    %171 = math.exp %170 : vector<2x16x16xf32>
    %cst_51 = arith.constant dense<0.000000e+00> : vector<2x16xf32>
    %172 = vector.multi_reduction <add>, %171, %cst_51 [2] : vector<2x16x16xf32> to vector<2x16xf32>
    %173 = vector.shape_cast %172 : vector<2x16xf32> to vector<2x16x1xf32>
    %174 = vector.broadcast %173 : vector<2x16x1xf32> to vector<2x16x16xf32>
    %175 = arith.divf %171, %174 : vector<2x16x16xf32>
    %176 = vector.extract_strided_slice %63 {offsets = [0, 0, 8], sizes = [2, 16, 8], strides = [1, 1, 1]} : vector<2x16x16xf32> to vector<2x16x8xf32>
    "tpu.trace_start"() <{level = 10 : i32, message = "bfl,blo->bfo"}> : () -> ()
    %cst_52 = arith.constant dense<0.000000e+00> : vector<2x16x8xf32>
    %177 = tpu.matmul %175, %176, %cst_52 {dimension_numbers = #tpu.dot_dimension_numbers<[2], [1], [1], [2], [0, 0, 0, 1, 1, 2], [0], [0]>} : vector<2x16x16xf32>, vector<2x16x8xf32>, vector<2x16x8xf32> -> vector<2x16x8xf32>
    "tpu.trace_stop"() : () -> ()
    %178 = arith.addf %129, %177 : vector<2x16x8xf32>
    %c0_53 = arith.constant 0 : index
    %c0_54 = arith.constant 0 : index
    %c0_55 = arith.constant 0 : index
    %179 = vector.load %arg7[%c0_53, %c0_54, %c0_55] : memref<1x16x8xf32, #tpu.memory_space<vmem>>, vector<1x16x8xf32>
    %180 = vector.shape_cast %179 : vector<1x16x8xf32> to vector<16x8xf32>
    %181 = vector.shape_cast %180 : vector<16x8xf32> to vector<1x16x8xf32>
    %182 = vector.broadcast %181 : vector<1x16x8xf32> to vector<2x16x8xf32>
    %183 = arith.addf %178, %182 : vector<2x16x8xf32>
    %c0_56 = arith.constant 0 : index
    %c0_57 = arith.constant 0 : index
    %c0_58 = arith.constant 0 : index
    %c0_59 = arith.constant 0 : index
    %184 = vector.load %arg8[%c0_56, %c0_57, %c0_58, %c0_59] : memref<1x2x16x8xf32, #tpu.memory_space<vmem>>, vector<1x2x16x8xf32>
    %185 = vector.shape_cast %184 : vector<1x2x16x8xf32> to vector<2x16x8xf32>
    %186 = vector.shape_cast %183 : vector<2x16x8xf32> to vector<1x2x16x8xf32>
    tpu.vector_store %arg8[%c0_56, %c0_57, %c0_58, %c0_59], %186 {strides = array<i32>} : memref<1x2x16x8xf32, #tpu.memory_space<vmem>>, vector<1x2x16x8xf32>,
    return
  }
  func.func @transform_0(%arg0: i32) -> (i32, i32, i32, i32) {
    %c0_i32 = arith.constant 0 : i32
    %c0_i32_0 = arith.constant 0 : i32
    %c0_i32_1 = arith.constant 0 : i32
    %c0_i32_2 = arith.constant 0 : i32
    return %arg0, %c0_i32, %c0_i32_0, %c0_i32_1 : i32, i32, i32, i32
  }
  func.func @transform_1(%arg0: i32) -> (i32, i32, i32, i32) {
    %c0_i32 = arith.constant 0 : i32
    %c0_i32_0 = arith.constant 0 : i32
    %c0_i32_1 = arith.constant 0 : i32
    %c0_i32_2 = arith.constant 0 : i32
    return %arg0, %c0_i32, %c0_i32_0, %c0_i32_1 : i32, i32, i32, i32
  }
  func.func @transform_2(%arg0: i32) -> (i32, i32, i32, i32) {
    %c0_i32 = arith.constant 0 : i32
    %c0_i32_0 = arith.constant 0 : i32
    %c0_i32_1 = arith.constant 0 : i32
    %c0_i32_2 = arith.constant 0 : i32
    return %arg0, %c0_i32, %c0_i32_0, %c0_i32_1 : i32, i32, i32, i32
  }
  func.func @transform_3(%arg0: i32) -> (i32, i32, i32) {
    %c0_i32 = arith.constant 0 : i32
    %c0_i32_0 = arith.constant 0 : i32
    %c0_i32_1 = arith.constant 0 : i32
    return %arg0, %c0_i32, %c0_i32_0 : i32, i32, i32
  }
  func.func @transform_4(%arg0: i32) -> (i32, i32, i32) {
    %c0_i32 = arith.constant 0 : i32
    %c0_i32_0 = arith.constant 0 : i32
    %c0_i32_1 = arith.constant 0 : i32
    return %arg0, %c0_i32, %c0_i32_0 : i32, i32, i32
  }
  func.func @transform_5(%arg0: i32) -> (i32, i32, i32) {
    %c0_i32 = arith.constant 0 : i32
    %c0_i32_0 = arith.constant 0 : i32
    %c0_i32_1 = arith.constant 0 : i32
    return %arg0, %c0_i32, %c0_i32_0 : i32, i32, i32
  }
  func.func @transform_6(%arg0: i32) -> (i32, i32, i32) {
    %c0_i32 = arith.constant 0 : i32
    %c0_i32_0 = arith.constant 0 : i32
    %c0_i32_1 = arith.constant 0 : i32
    return %arg0, %c0_i32, %c0_i32_0 : i32, i32, i32
  }
  func.func @transform_7(%arg0: i32) -> (i32, i32, i32, i32) {
    %c0_i32 = arith.constant 0 : i32
    %c0_i32_0 = arith.constant 0 : i32
    %c0_i32_1 = arith.constant 0 : i32
    %c0_i32_2 = arith.constant 0 : i32
    return %arg0, %c0_i32, %c0_i32_0, %c0_i32_1 : i32, i32, i32, i32
  }
}

</mosaic_0001>

<llo_original>
// kernel: tpu_custom_call.1
$region0: #{tpu_custom_call.1}
  #allocation0 [shape = 'u32[]', space=smem, size = 0x4, offset = 0x4, fixed_abs, tag = 'smem constant byte address 0x4 - core index']
  #allocation1 [shape = 'u32[144,128]{1,0:T(1,128)}', space=vmem, size = 0x12000, scoped, tag = 'internal scratch']
  %s0 = inlined_call_operand.vmem [shape: f32[4,2,16,4], index: 0, kind: input, shape index: {}]
  %s1 = inlined_call_operand.vmem [shape: f32[4,4,16,8], index: 1, kind: input, shape index: {}]
  %s2 = inlined_call_operand.vmem [shape: f32[4,2,16,16], index: 2, kind: input, shape index: {}]
  %s3 = inlined_call_operand.vmem [shape: f32[4,2,16], index: 3, kind: input, shape index: {}]
  %s4 = inlined_call_operand.vmem [shape: f32[4,2,2], index: 4, kind: input, shape index: {}]
  %s5 = inlined_call_operand.vmem [shape: f32[4,4,16], index: 5, kind: input, shape index: {}]
  %s6 = inlined_call_operand.vmem [shape: f32[4,16,8], index: 6, kind: input, shape index: {}]
  %s7 = inlined_call_operand.vmem [shape: f32[4,2,16,8], index: 7, kind: output, shape index: {}]
  %s8 = sld [smem:[#allocation0]]
  $region61: #{tpu_custom_call.1} parent=0
    _
  %s10 = ssub.s32 1, %s8
  %s11 = scalar_select 0, %s10, %s8
  loop: start=0, step=1, limit=6
  $region2: #{tpu_custom_call.1} parent=0 // loop_pre_header
    _
  $region3: #{tpu_custom_call.1} parent=0 // loop_header
    %s13 = sphi 0, %s17
    %p14 = scmp.ge.s32.totalorder %s13, 6
    %s23 = sphi 0, %s25
    %s26 = sphi 0, %s23
    %s27 = sphi 0, %s26
    %s43 = sphi 0, %s27
    %s49 = sphi 0, %s51
    %s52 = sphi 0, %s49
    %s53 = sphi 0, %s52
    %s69 = sphi 0, %s53
    %s75 = sphi 0, %s77
    %s78 = sphi 0, %s75
    %s79 = sphi 0, %s78
    %s95 = sphi 0, %s79
    %s101 = sphi 0, %s103
    %s104 = sphi 0, %s101
    %s105 = sphi 0, %s104
    %s121 = sphi 0, %s105
    %s127 = sphi 0, %s129
    %s130 = sphi 0, %s127
    %s131 = sphi 0, %s130
    %s147 = sphi 0, %s131
    %s153 = sphi 0, %s155
    %s156 = sphi 0, %s153
    %s157 = sphi 0, %s156
    %s173 = sphi 0, %s157
    %s179 = sphi 0, %s181
    %s182 = sphi 0, %s179
    %s183 = sphi 0, %s182
    %s199 = sphi 0, %s183
    %s205 = sphi 0, %s207
    %s208 = sphi 0, %s205
    %s209 = sphi 0, %s208
    %s225 = sphi 0, %s209
  $region4: #{tpu_custom_call.1} parent=0 // loop_header_branch
    %16 = sbr.rel (%p14) target = $region8
  $region5: #{tpu_custom_call.1} parent=0 // loop_body
    %s18 = ssub.s32 %s13, 1
    %s19 = ssub.s32 %s13, 2
    %s20 = sadd.s32 %s13, 1
    %s21 = ssub.s32 %s13, %s20
    %p22 = scmp.eq.s32.totalorder %s21, 0
    %s24 = sadd.s32 %s23, 1
    %s25 = scalar_select %p22, %s23, %s24
    %p28 = pneg %p22
    %p29 = scmp.eq.s32.totalorder %s13, 3
    %p30 = por %p28, %p29
    %p31 = scmp.ne.s32.totalorder %s23, %s26
    %p32 = scmp.eq.s32.totalorder %s13, 0
    %p33 = por %p31, %p32
    %p34 = scmp.ne.s32.totalorder %s23, %s26
    %p35 = scmp.eq.s32.totalorder %s18, 3
    %p36 = por %p34, %p35
    %p37 = scmp.ne.s32.totalorder %s26, %s27
    %p38 = scmp.eq.s32.totalorder %s18, 0
    %p39 = por %p37, %p38
    %p40 = scmp.ne.s32.totalorder %s26, %s27
    %p41 = scmp.eq.s32.totalorder %s19, 3
    %p42 = por %p40, %p41
    %p44 = scmp.ne.s32.totalorder %s27, %s43
    %p45 = scmp.eq.s32.totalorder %s19, 0
    %p46 = por %p44, %p45
    %s47 = ssub.s32 %s13, %s20
    %p48 = scmp.eq.s32.totalorder %s47, 0
    %s50 = sadd.s32 %s49, 1
    %s51 = scalar_select %p48, %s49, %s50
    %p54 = pneg %p48
    %p55 = scmp.eq.s32.totalorder %s13, 3
    %p56 = por %p54, %p55
    %p57 = scmp.ne.s32.totalorder %s49, %s52
    %p58 = scmp.eq.s32.totalorder %s13, 0
    %p59 = por %p57, %p58
    %p60 = scmp.ne.s32.totalorder %s49, %s52
    %p61 = scmp.eq.s32.totalorder %s18, 3
    %p62 = por %p60, %p61
    %p63 = scmp.ne.s32.totalorder %s52, %s53
    %p64 = scmp.eq.s32.totalorder %s18, 0
    %p65 = por %p63, %p64
    %p66 = scmp.ne.s32.totalorder %s52, %s53
    %p67 = scmp.eq.s32.totalorder %s19, 3
    %p68 = por %p66, %p67
    %p70 = scmp.ne.s32.totalorder %s53, %s69
    %p71 = scmp.eq.s32.totalorder %s19, 0
    %p72 = por %p70, %p71
    %s73 = ssub.s32 %s13, %s20
    %p74 = scmp.eq.s32.totalorder %s73, 0
    %s76 = sadd.s32 %s75, 1
    %s77 = scalar_select %p74, %s75, %s76
    %p80 = pneg %p74
    %p81 = scmp.eq.s32.totalorder %s13, 3
    %p82 = por %p80, %p81
    %p83 = scmp.ne.s32.totalorder %s75, %s78
    %p84 = scmp.eq.s32.totalorder %s13, 0
    %p85 = por %p83, %p84
    %p86 = scmp.ne.s32.totalorder %s75, %s78
    %p87 = scmp.eq.s32.totalorder %s18, 3
    %p88 = por %p86, %p87
    %p89 = scmp.ne.s32.totalorder %s78, %s79
    %p90 = scmp.eq.s32.totalorder %s18, 0
    %p91 = por %p89, %p90
    %p92 = scmp.ne.s32.totalorder %s78, %s79
    %p93 = scmp.eq.s32.totalorder %s19, 3
    %p94 = por %p92, %p93
    %p96 = scmp.ne.s32.totalorder %s79, %s95
    %p97 = scmp.eq.s32.totalorder %s19, 0
    %p98 = por %p96, %p97
    %s99 = ssub.s32 %s13, %s20
    %p100 = scmp.eq.s32.totalorder %s99, 0
    %s102 = sadd.s32 %s101, 1
    %s103 = scalar_select %p100, %s101, %s102
    %p106 = pneg %p100
    %p107 = scmp.eq.s32.totalorder %s13, 3
    %p108 = por %p106, %p107
    %p109 = scmp.ne.s32.totalorder %s101, %s104
    %p110 = scmp.eq.s32.totalorder %s13, 0
    %p111 = por %p109, %p110
    %p112 = scmp.ne.s32.totalorder %s101, %s104
    %p113 = scmp.eq.s32.totalorder %s18, 3
    %p114 = por %p112, %p113
    %p115 = scmp.ne.s32.totalorder %s104, %s105
    %p116 = scmp.eq.s32.totalorder %s18, 0
    %p117 = por %p115, %p116
    %p118 = scmp.ne.s32.totalorder %s104, %s105
    %p119 = scmp.eq.s32.totalorder %s19, 3
    %p120 = por %p118, %p119
    %p122 = scmp.ne.s32.totalorder %s105, %s121
    %p123 = scmp.eq.s32.totalorder %s19, 0
    %p124 = por %p122, %p123
    %s125 = ssub.s32 %s13, %s20
    %p126 = scmp.eq.s32.totalorder %s125, 0
    %s128 = sadd.s32 %s127, 1
    %s129 = scalar_select %p126, %s127, %s128
    %p132 = pneg %p126
    %p133 = scmp.eq.s32.totalorder %s13, 3
    %p134 = por %p132, %p133
    %p135 = scmp.ne.s32.totalorder %s127, %s130
    %p136 = scmp.eq.s32.totalorder %s13, 0
    %p137 = por %p135, %p136
    %p138 = scmp.ne.s32.totalorder %s127, %s130
    %p139 = scmp.eq.s32.totalorder %s18, 3
    %p140 = por %p138, %p139
    %p141 = scmp.ne.s32.totalorder %s130, %s131
    %p142 = scmp.eq.s32.totalorder %s18, 0
    %p143 = por %p141, %p142
    %p144 = scmp.ne.s32.totalorder %s130, %s131
    %p145 = scmp.eq.s32.totalorder %s19, 3
    %p146 = por %p144, %p145
    %p148 = scmp.ne.s32.totalorder %s131, %s147
    %p149 = scmp.eq.s32.totalorder %s19, 0
    %p150 = por %p148, %p149
    %s151 = ssub.s32 %s13, %s20
    %p152 = scmp.eq.s32.totalorder %s151, 0
    %s154 = sadd.s32 %s153, 1
    %s155 = scalar_select %p152, %s153, %s154
    %p158 = pneg %p152
    %p159 = scmp.eq.s32.totalorder %s13, 3
    %p160 = por %p158, %p159
    %p161 = scmp.ne.s32.totalorder %s153, %s156
    %p162 = scmp.eq.s32.totalorder %s13, 0
    %p163 = por %p161, %p162
    %p164 = scmp.ne.s32.totalorder %s153, %s156
    %p165 = scmp.eq.s32.totalorder %s18, 3
    %p166 = por %p164, %p165
    %p167 = scmp.ne.s32.totalorder %s156, %s157
    %p168 = scmp.eq.s32.totalorder %s18, 0
    %p169 = por %p167, %p168
    %p170 = scmp.ne.s32.totalorder %s156, %s157
    %p171 = scmp.eq.s32.totalorder %s19, 3
    %p172 = por %p170, %p171
    %p174 = scmp.ne.s32.totalorder %s157, %s173
    %p175 = scmp.eq.s32.totalorder %s19, 0
    %p176 = por %p174, %p175
    %s177 = ssub.s32 %s13, %s20
    %p178 = scmp.eq.s32.totalorder %s177, 0
    %s180 = sadd.s32 %s179, 1
    %s181 = scalar_select %p178, %s179, %s180
    %p184 = pneg %p178
    %p185 = scmp.eq.s32.totalorder %s13, 3
    %p186 = por %p184, %p185
    %p187 = scmp.ne.s32.totalorder %s179, %s182
    %p188 = scmp.eq.s32.totalorder %s13, 0
    %p189 = por %p187, %p188
    %p190 = scmp.ne.s32.totalorder %s179, %s182
    %p191 = scmp.eq.s32.totalorder %s18, 3
    %p192 = por %p190, %p191
    %p193 = scmp.ne.s32.totalorder %s182, %s183
    %p194 = scmp.eq.s32.totalorder %s18, 0
    %p195 = por %p193, %p194
    %p196 = scmp.ne.s32.totalorder %s182, %s183
    %p197 = scmp.eq.s32.totalorder %s19, 3
    %p198 = por %p196, %p197
    %p200 = scmp.ne.s32.totalorder %s183, %s199
    %p201 = scmp.eq.s32.totalorder %s19, 0
    %p202 = por %p200, %p201
    %s203 = ssub.s32 %s13, %s20
    %p204 = scmp.eq.s32.totalorder %s203, 0
    %s206 = sadd.s32 %s205, 1
    %s207 = scalar_select %p204, %s205, %s206
    %p210 = pneg %p204
    %p211 = scmp.eq.s32.totalorder %s13, 3
    %p212 = por %p210, %p211
    %p213 = scmp.ne.s32.totalorder %s205, %s208
    %p214 = scmp.eq.s32.totalorder %s13, 0
    %p215 = por %p213, %p214
    %p216 = scmp.ne.s32.totalorder %s205, %s208
    %p217 = scmp.eq.s32.totalorder %s18, 3
    %p218 = por %p216, %p217
    %p219 = scmp.ne.s32.totalorder %s208, %s209
    %p220 = scmp.eq.s32.totalorder %s18, 0
    %p221 = por %p219, %p220
    %p222 = scmp.ne.s32.totalorder %s208, %s209
    %p223 = scmp.eq.s32.totalorder %s19, 3
    %p224 = por %p222, %p223
    %p226 = scmp.ne.s32.totalorder %s209, %s225
    %p227 = scmp.eq.s32.totalorder %s19, 0
    %p228 = por %p226, %p227
    %p229 = scmp.le.s32.totalorder 1, %s13
    %p230 = scmp.lt.s32.totalorder %s13, 5
    %p231 = pnand %p229, %p230
    %p232 = pneg %p231
    // Predicated region
    $region9: #{tpu_custom_call.1} parent=5 // pred_check
      _
    $region10: #{tpu_custom_call.1} parent=5 // pred_check_branch
      %234 = sbr.rel (%p231) target = $region12
    $region11: #{tpu_custom_call.1} parent=5 // pred_region
      %s235 = ssub.s32 %s13, 1
    $region12: #{tpu_custom_call.1} parent=5 // pred_fallthru
      _
    %p236 = scmp.lt.s32.totalorder %s13, 4
    // Predicated region
    $region13: #{tpu_custom_call.1} parent=5 // pred_check
      %p237 = pneg %p236
    $region14: #{tpu_custom_call.1} parent=5 // pred_check_branch
      %239 = sbr.rel (%p237) target = $region16
    $region15: #{tpu_custom_call.1} parent=5 // pred_region
      // Predicated region
      $region17: #{tpu_custom_call.1} parent=15 // pred_check
        %p240 = pneg %p33
      $region18: #{tpu_custom_call.1} parent=15 // pred_check_branch
        %242 = sbr.rel (%p240) target = $region20
      $region19: #{tpu_custom_call.1} parent=15 // pred_region
        %p243 = scmp.lt.s32.totalorder %s13, 3
        %s244 = scalar_select %p243, %s13, 3
        %s245 = smul.addr %s244, 4
        %s246 = smul.addr %s245, 8
        %s247 = scalar_lea.vmem %s0, %s246
      $region20: #{tpu_custom_call.1} parent=15 // pred_fallthru
        _
      // Predicated region
      $region21: #{tpu_custom_call.1} parent=15 // pred_check
        %p248 = pneg %p59
      $region22: #{tpu_custom_call.1} parent=15 // pred_check_branch
        %250 = sbr.rel (%p248) target = $region24
      $region23: #{tpu_custom_call.1} parent=15 // pred_region
        %p251 = scmp.lt.s32.totalorder %s13, 3
        %s252 = scalar_select %p251, %s13, 3
        %s253 = smul.addr %s252, 8
        %s254 = smul.addr %s253, 8
        %s255 = scalar_lea.vmem %s1, %s254
      $region24: #{tpu_custom_call.1} parent=15 // pred_fallthru
        _
      // Predicated region
      $region25: #{tpu_custom_call.1} parent=15 // pred_check
        %p256 = pneg %p85
      $region26: #{tpu_custom_call.1} parent=15 // pred_check_branch
        %258 = sbr.rel (%p256) target = $region28
      $region27: #{tpu_custom_call.1} parent=15 // pred_region
        %p259 = scmp.lt.s32.totalorder %s13, 3
        %s260 = scalar_select %p259, %s13, 3
        %s261 = smul.addr %s260, 4
        %s262 = smul.addr %s261, 8
        %s263 = scalar_lea.vmem %s2, %s262
      $region28: #{tpu_custom_call.1} parent=15 // pred_fallthru
        _
      // Predicated region
      $region29: #{tpu_custom_call.1} parent=15 // pred_check
        %p264 = pneg %p111
      $region30: #{tpu_custom_call.1} parent=15 // pred_check_branch
        %266 = sbr.rel (%p264) target = $region32
      $region31: #{tpu_custom_call.1} parent=15 // pred_region
        %p267 = scmp.lt.s32.totalorder %s13, 3
        %s268 = scalar_select %p267, %s13, 3
        %s269 = smul.addr %s268, 2
        %s270 = scalar_lea.vmem %s3, %s269
      $region32: #{tpu_custom_call.1} parent=15 // pred_fallthru
        _
      // Predicated region
      $region33: #{tpu_custom_call.1} parent=15 // pred_check
        %p271 = pneg %p137
      $region34: #{tpu_custom_call.1} parent=15 // pred_check_branch
        %273 = sbr.rel (%p271) target = $region36
      $region35: #{tpu_custom_call.1} parent=15 // pred_region
        %p274 = scmp.lt.s32.totalorder %s13, 3
        %s275 = scalar_select %p274, %s13, 3
        %s276 = smul.addr %s275, 2
        %s277 = scalar_lea.vmem %s4, %s276
      $region36: #{tpu_custom_call.1} parent=15 // pred_fallthru
        _
      // Predicated region
      $region37: #{tpu_custom_call.1} parent=15 // pred_check
        %p278 = pneg %p163
      $region38: #{tpu_custom_call.1} parent=15 // pred_check_branch
        %280 = sbr.rel (%p278) target = $region40
      $region39: #{tpu_custom_call.1} parent=15 // pred_region
        %p281 = scmp.lt.s32.totalorder %s13, 3
        %s282 = scalar_select %p281, %s13, 3
        %s283 = smul.addr %s282, 4
        %s284 = scalar_lea.vmem %s5, %s283
      $region40: #{tpu_custom_call.1} parent=15 // pred_fallthru
        _
      // Predicated region
      $region41: #{tpu_custom_call.1} parent=15 // pred_check
        %p285 = pneg %p189
      $region42: #{tpu_custom_call.1} parent=15 // pred_check_branch
        %287 = sbr.rel (%p285) target = $region44
      $region43: #{tpu_custom_call.1} parent=15 // pred_region
        %p288 = scmp.lt.s32.totalorder %s13, 3
        %s289 = scalar_select %p288, %s13, 3
        %s290 = smul.addr %s289, 2
        %s291 = smul.addr %s290, 8
        %s292 = scalar_lea.vmem %s6, %s291
      $region44: #{tpu_custom_call.1} parent=15 // pred_fallthru
        _
    $region16: #{tpu_custom_call.1} parent=5 // pred_fallthru
      _
    %p293 = scmp.le.s32.totalorder 1, %s13
    %p294 = scmp.lt.s32.totalorder %s13, 5
    %p295 = pnand %p293, %p294
    %p296 = pneg %p295
    // Predicated region
    $region45: #{tpu_custom_call.1} parent=5 // pred_check
      _
    $region46: #{tpu_custom_call.1} parent=5 // pred_check_branch
      %298 = sbr.rel (%p295) target = $region48
    $region47: #{tpu_custom_call.1} parent=5 // pred_region
      %s299 = ssub.s32 %s13, 1
      %p300 = scmp.lt.s32.totalorder %s18, 3
      %s301 = scalar_select %p300, %s18, 3
      %s302 = smul.addr %s301, 4
      %s303 = smul.addr %s302, 8
      %s304 = scalar_lea.vmem %s0, %s303
      %p305 = pneg %p39
      %p306 = pneg %p36
      %p307 = scmp.lt.s32.totalorder %s18, 3
      %s308 = scalar_select %p307, %s18, 3
      %s309 = smul.addr %s308, 8
      %s310 = smul.addr %s309, 8
      %s311 = scalar_lea.vmem %s1, %s310
      %p312 = pneg %p65
      %p313 = pneg %p62
      %p314 = scmp.lt.s32.totalorder %s18, 3
      %s315 = scalar_select %p314, %s18, 3
      %s316 = smul.addr %s315, 4
      %s317 = smul.addr %s316, 8
      %s318 = scalar_lea.vmem %s2, %s317
      %p319 = pneg %p91
      %p320 = pneg %p88
      %p321 = scmp.lt.s32.totalorder %s18, 3
      %s322 = scalar_select %p321, %s18, 3
      %s323 = smul.addr %s322, 2
      %s324 = scalar_lea.vmem %s3, %s323
      %p325 = pneg %p117
      %p326 = pneg %p114
      %p327 = scmp.lt.s32.totalorder %s18, 3
      %s328 = scalar_select %p327, %s18, 3
      %s329 = smul.addr %s328, 2
      %s330 = scalar_lea.vmem %s4, %s329
      %p331 = pneg %p143
      %p332 = pneg %p140
      %p333 = scmp.lt.s32.totalorder %s18, 3
      %s334 = scalar_select %p333, %s18, 3
      %s335 = smul.addr %s334, 4
      %s336 = scalar_lea.vmem %s5, %s335
      %p337 = pneg %p169
      %p338 = pneg %p166
      %p339 = scmp.lt.s32.totalorder %s18, 3
      %s340 = scalar_select %p339, %s18, 3
      %s341 = smul.addr %s340, 2
      %s342 = smul.addr %s341, 8
      %s343 = scalar_lea.vmem %s6, %s342
      %p344 = pneg %p195
      %p345 = pneg %p192
      %p346 = pneg %p221
      %p347 = pneg %p218
      %p348 = scmp.lt.s32.totalorder %s18, 3
      %s349 = scalar_select %p348, %s18, 3
      %s350 = smul.addr %s349, 4
      %s351 = smul.addr %s350, 8
      %s352 = scalar_lea.vmem %s7, %s351
      %p353 = scmp.lt.s32.totalorder %s18, 3
      %s354 = scalar_select %p353, %s18, 3
      %s355 = smul.addr %s354, 4
      %s356 = smul.addr %s355, 8
      %s357 = scalar_lea.vmem %s0, %s356
      %p358 = scmp.lt.s32.totalorder %s18, 3
      %s359 = scalar_select %p358, %s18, 3
      %s360 = smul.addr %s359, 8
      %s361 = smul.addr %s360, 8
      %s362 = scalar_lea.vmem %s1, %s361
      %p363 = scmp.lt.s32.totalorder %s18, 3
      %s364 = scalar_select %p363, %s18, 3
      %s365 = smul.addr %s364, 4
      %s366 = smul.addr %s365, 8
      %s367 = scalar_lea.vmem %s2, %s366
      %p368 = scmp.lt.s32.totalorder %s18, 3
      %s369 = scalar_select %p368, %s18, 3
      %s370 = smul.addr %s369, 2
      %s371 = scalar_lea.vmem %s3, %s370
      %p372 = scmp.lt.s32.totalorder %s18, 3
      %s373 = scalar_select %p372, %s18, 3
      %s374 = smul.addr %s373, 2
      %s375 = scalar_lea.vmem %s4, %s374
      %p376 = scmp.lt.s32.totalorder %s18, 3
      %s377 = scalar_select %p376, %s18, 3
      %s378 = smul.addr %s377, 4
      %s379 = scalar_lea.vmem %s5, %s378
      %p380 = scmp.lt.s32.totalorder %s18, 3
      %s381 = scalar_select %p380, %s18, 3
      %s382 = smul.addr %s381, 2
      %s383 = smul.addr %s382, 8
      %s384 = scalar_lea.vmem %s6, %s383
      %p385 = scmp.lt.s32.totalorder %s18, 3
      %s386 = scalar_select %p385, %s18, 3
      %s387 = smul.addr %s386, 4
      %s388 = smul.addr %s387, 8
      %s389 = scalar_lea.vmem %s7, %s388
      %v390 = vld [vmem:[%s357] sm:$0xff]
      %v391 = vld [vmem:[%s357 + $0x8] sm:$0xff]
      %v392 = vld [vmem:[%s357 + $0x10] sm:$0xff]
      %v393 = vld [vmem:[%s357 + $0x18] sm:$0xff]
      %v394 = vld [vmem:[%s362] sm:$0xff]
      %v395 = vld [vmem:[%s362 + $0x8] sm:$0xff]
      %397 = vset.pattern.permute.xlu0 0
      %398 = vperm.xlu0 %397, %v390
      %v399 = vpop.permute.xlu0 %398
      %402 = vset.pattern.permute.xlu0 0
      %403 = vperm.xlu0 %402, %v391
      %v404 = vpop.permute.xlu0 %403
      %407 = vset.pattern.permute.xlu0 0
      %408 = vperm.xlu0 %407, %v392
      %v409 = vpop.permute.xlu0 %408
      %412 = vset.pattern.permute.xlu0 0
      %413 = vperm.xlu0 %412, %v393
      %v414 = vpop.permute.xlu0 %413
      %v416 = vmul.f32 %v399, %v394
      %v417 = vmul.f32 %v404, %v395
      %v418 = vmul.f32 %v409, %v394
      %v419 = vmul.f32 %v414, %v395
      %v420 = vadd.f32 %v416, 0.0
      %v421 = vadd.f32 %v417, 0.0
      %v422 = vadd.f32 %v418, 0.0
      %v423 = vadd.f32 %v419, 0.0
      %v424 = vld [vmem:[%s379] sm:$0x1]
      %v425 = vlaneseq
      %v426 = vshrl.u32 %v425, 7
      %v427 = vsub.s32 0, %v426
      %v428 = vrot.slane %v424, %v427
      %v429 = vmul.f32 %v399, %v428
      %v430 = vmul.f32 %v404, %v428
      %v431 = vmul.f32 %v409, %v428
      %v432 = vmul.f32 %v414, %v428
      %v433 = vadd.f32 %v429, 0.0
      %v434 = vadd.f32 %v430, 0.0
      %v435 = vadd.f32 %v431, 0.0
      %v436 = vadd.f32 %v432, 0.0
      %s437 = scalar_lea.vmem %s362, 16
      %v438 = vld [vmem:[%s437] sm:$0xff]
      %v439 = vld [vmem:[%s437 + $0x8] sm:$0xff]
      %440 = vset.pattern.permute.xlu0 1
      %441 = vperm.xlu0 %440, %v390
      %v442 = vpop.permute.xlu0 %441
      %444 = vset.pattern.permute.xlu0 1
      %445 = vperm.xlu0 %444, %v391
      %v446 = vpop.permute.xlu0 %445
      %448 = vset.pattern.permute.xlu0 1
      %449 = vperm.xlu0 %448, %v392
      %v450 = vpop.permute.xlu0 %449
      %452 = vset.pattern.permute.xlu0 1
      %453 = vperm.xlu0 %452, %v393
      %v454 = vpop.permute.xlu0 %453
      %v456 = vmul.f32 %v442, %v438
      %v457 = vmul.f32 %v446, %v439
      %v458 = vmul.f32 %v450, %v438
      %v459 = vmul.f32 %v454, %v439
      %v460 = vadd.f32 %v420, %v456
      %v461 = vadd.f32 %v421, %v457
      %v462 = vadd.f32 %v422, %v458
      %v463 = vadd.f32 %v423, %v459
      %v464 = vld [vmem:[%s379 + $0x1] sm:$0x1]
      %v465 = vlaneseq
      %v466 = vshrl.u32 %v465, 7
      %v467 = vsub.s32 0, %v466
      %v468 = vrot.slane %v464, %v467
      %v469 = vmul.f32 %v442, %v468
      %v470 = vmul.f32 %v446, %v468
      %v471 = vmul.f32 %v450, %v468
      %v472 = vmul.f32 %v454, %v468
      %v473 = vadd.f32 %v433, %v469
      %v474 = vadd.f32 %v434, %v470
      %v475 = vadd.f32 %v435, %v471
      %v476 = vadd.f32 %v436, %v472
      %s477 = scalar_lea.vmem %s362, 32
      %v478 = vld [vmem:[%s477] sm:$0xff]
      %v479 = vld [vmem:[%s477 + $0x8] sm:$0xff]
      %480 = vset.pattern.permute.xlu0 2
      %481 = vperm.xlu0 %480, %v390
      %v482 = vpop.permute.xlu0 %481
      %484 = vset.pattern.permute.xlu0 2
      %485 = vperm.xlu0 %484, %v391
      %v486 = vpop.permute.xlu0 %485
      %488 = vset.pattern.permute.xlu0 2
      %489 = vperm.xlu0 %488, %v392
      %v490 = vpop.permute.xlu0 %489
      %492 = vset.pattern.permute.xlu0 2
      %493 = vperm.xlu0 %492, %v393
      %v494 = vpop.permute.xlu0 %493
      %v496 = vmul.f32 %v482, %v478
      %v497 = vmul.f32 %v486, %v479
      %v498 = vmul.f32 %v490, %v478
      %v499 = vmul.f32 %v494, %v479
      %v500 = vadd.f32 %v460, %v496
      %v501 = vadd.f32 %v461, %v497
      %v502 = vadd.f32 %v462, %v498
      %v503 = vadd.f32 %v463, %v499
      %v504 = vld [vmem:[%s379 + $0x2] sm:$0x1]
      %v505 = vlaneseq
      %v506 = vshrl.u32 %v505, 7
      %v507 = vsub.s32 0, %v506
      %v508 = vrot.slane %v504, %v507
      %v509 = vmul.f32 %v482, %v508
      %v510 = vmul.f32 %v486, %v508
      %v511 = vmul.f32 %v490, %v508
      %v512 = vmul.f32 %v494, %v508
      %v513 = vadd.f32 %v473, %v509
      %v514 = vadd.f32 %v474, %v510
      %v515 = vadd.f32 %v475, %v511
      %v516 = vadd.f32 %v476, %v512
      %s517 = scalar_lea.vmem %s362, 48
      %v518 = vld [vmem:[%s517] sm:$0xff]
      %v519 = vld [vmem:[%s517 + $0x8] sm:$0xff]
      %520 = vset.pattern.permute.xlu0 3
      %521 = vperm.xlu0 %520, %v390
      %v522 = vpop.permute.xlu0 %521
      %524 = vset.pattern.permute.xlu0 3
      %525 = vperm.xlu0 %524, %v391
      %v526 = vpop.permute.xlu0 %525
      %528 = vset.pattern.permute.xlu0 3
      %529 = vperm.xlu0 %528, %v392
      %v530 = vpop.permute.xlu0 %529
      %532 = vset.pattern.permute.xlu0 3
      %533 = vperm.xlu0 %532, %v393
      %v534 = vpop.permute.xlu0 %533
      %v536 = vmul.f32 %v522, %v518
      %v537 = vmul.f32 %v526, %v519
      %v538 = vmul.f32 %v530, %v518
      %v539 = vmul.f32 %v534, %v519
      %v540 = vadd.f32 %v500, %v536
      %v541 = vadd.f32 %v501, %v537
      %v542 = vadd.f32 %v502, %v538
      %v543 = vadd.f32 %v503, %v539
      %v544 = vld [vmem:[%s379 + $0x3] sm:$0x1]
      %v545 = vlaneseq
      %v546 = vshrl.u32 %v545, 7
      %v547 = vsub.s32 0, %v546
      %v548 = vrot.slane %v544, %v547
      %v549 = vmul.f32 %v522, %v548
      %v550 = vmul.f32 %v526, %v548
      %v551 = vmul.f32 %v530, %v548
      %v552 = vmul.f32 %v534, %v548
      %v553 = vadd.f32 %v513, %v549
      %v554 = vadd.f32 %v514, %v550
      %v555 = vadd.f32 %v515, %v551
      %v556 = vadd.f32 %v516, %v552
      %v557 = vld [vmem:[%s367] sm:$0xff]
      %v558 = vld [vmem:[%s367 + $0x8] sm:$0xff]
      %s559 = scalar_lea.vmem %s367, 16
      %v560 = vld [vmem:[%s559] sm:$0xff]
      %v561 = vld [vmem:[%s559 + $0x8] sm:$0xff]
      %v562 = vld [vmem:[%s371] sm:$0x1]
      %v563 = vld [vmem:[%s371 + $0x1] sm:$0x1]
      %v564 = vld [vmem:[%s375] sm:$0x3]
      %566 = vset.pattern.permute.xlu0 0
      %567 = vperm.xlu0 %566, %v540
      %v568 = vpop.permute.xlu0 %567
      %571 = vset.pattern.permute.xlu0 0
      %572 = vperm.xlu0 %571, %v541
      %v573 = vpop.permute.xlu0 %572
      %576 = vset.pattern.permute.xlu0 0
      %577 = vperm.xlu0 %576, %v542
      %v578 = vpop.permute.xlu0 %577
      %581 = vset.pattern.permute.xlu0 0
      %582 = vperm.xlu0 %581, %v543
      %v583 = vpop.permute.xlu0 %582
      %585 = vset.pattern.permute.xlu0 4
      %586 = vperm.xlu0 %585, %v540
      %v587 = vpop.permute.xlu0 %586
      %588 = vset.pattern.permute.xlu0 4
      %589 = vperm.xlu0 %588, %v541
      %v590 = vpop.permute.xlu0 %589
      %591 = vset.pattern.permute.xlu0 4
      %592 = vperm.xlu0 %591, %v542
      %v593 = vpop.permute.xlu0 %592
      %594 = vset.pattern.permute.xlu0 4
      %595 = vperm.xlu0 %594, %v543
      %v596 = vpop.permute.xlu0 %595
      %v597 = vlaneseq
      %v598 = vand.u32 %v597, 127
      %v599 = vlaneseq
      %v600 = vshrl.u32 %v599, 7
      %v601 = vsub.s32 %v598, %v600
      %v602 = vrot.slane %v587, %v601
      %v603 = vadd.s32 %v598, 4294967288
      %v604 = vlaneseq
      %v605 = vshrl.u32 %v604, 7
      %v606 = vsub.s32 %v603, %v605
      %v607 = vrot.slane %v590, %v606
      %vm608 = vcmask 130112
      %v609 = vsel %vm608, %v607, %v602
      %v610 = vlaneseq
      %v611 = vshrl.u32 %v610, 7
      %v612 = vsub.s32 %v598, %v611
      %v613 = vrot.slane %v593, %v612
      %v614 = vlaneseq
      %v615 = vshrl.u32 %v614, 7
      %v616 = vsub.s32 %v603, %v615
      %v617 = vrot.slane %v596, %v616
      %v618 = vsel %vm608, %v617, %v613
      %vm619 = vcmask 1042434
      %v620 = vsel %vm619, %v609, %v609
      %vm621 = vcmask 1043459
      %v622 = vsel %vm621, %v609, %v620
      %vm623 = vcmask 1044484
      %v624 = vsel %vm623, %v609, %v622
      %vm625 = vcmask 1045509
      %v626 = vsel %vm625, %v609, %v624
      %vm627 = vcmask 1046534
      %v628 = vsel %vm627, %v609, %v626
      %vm629 = vcmask 1047559
      %v630 = vsel %vm629, %v609, %v628
      %v631 = vsel %vm619, %v618, %v618
      %v632 = vsel %vm621, %v618, %v631
      %v633 = vsel %vm623, %v618, %v632
      %v634 = vsel %vm625, %v618, %v633
      %v635 = vsel %vm627, %v618, %v634
      %v636 = vsel %vm629, %v618, %v635
      %v639 = vmul.f32 %v568, %v630
      %v640 = vmul.f32 %v573, %v630
      %v641 = vmul.f32 %v578, %v636
      %v642 = vmul.f32 %v583, %v636
      %643 = vset.pattern.permute.xlu0 1
      %644 = vperm.xlu0 %643, %v540
      %v645 = vpop.permute.xlu0 %644
      %647 = vset.pattern.permute.xlu0 1
      %648 = vperm.xlu0 %647, %v541
      %v649 = vpop.permute.xlu0 %648
      %651 = vset.pattern.permute.xlu0 1
      %652 = vperm.xlu0 %651, %v542
      %v653 = vpop.permute.xlu0 %652
      %655 = vset.pattern.permute.xlu0 1
      %656 = vperm.xlu0 %655, %v543
      %v657 = vpop.permute.xlu0 %656
      %659 = vset.pattern.permute.xlu0 5
      %660 = vperm.xlu0 %659, %v540
      %v661 = vpop.permute.xlu0 %660
      %662 = vset.pattern.permute.xlu0 5
      %663 = vperm.xlu0 %662, %v541
      %v664 = vpop.permute.xlu0 %663
      %665 = vset.pattern.permute.xlu0 5
      %666 = vperm.xlu0 %665, %v542
      %v667 = vpop.permute.xlu0 %666
      %668 = vset.pattern.permute.xlu0 5
      %669 = vperm.xlu0 %668, %v543
      %v670 = vpop.permute.xlu0 %669
      %v671 = vlaneseq
      %v672 = vshrl.u32 %v671, 7
      %v673 = vsub.s32 %v598, %v672
      %v674 = vrot.slane %v661, %v673
      %v675 = vlaneseq
      %v676 = vshrl.u32 %v675, 7
      %v677 = vsub.s32 %v603, %v676
      %v678 = vrot.slane %v664, %v677
      %v679 = vsel %vm608, %v678, %v674
      %v680 = vlaneseq
      %v681 = vshrl.u32 %v680, 7
      %v682 = vsub.s32 %v598, %v681
      %v683 = vrot.slane %v667, %v682
      %v684 = vlaneseq
      %v685 = vshrl.u32 %v684, 7
      %v686 = vsub.s32 %v603, %v685
      %v687 = vrot.slane %v670, %v686
      %v688 = vsel %vm608, %v687, %v683
      %v689 = vsel %vm619, %v679, %v679
      %v690 = vsel %vm621, %v679, %v689
      %v691 = vsel %vm623, %v679, %v690
      %v692 = vsel %vm625, %v679, %v691
      %v693 = vsel %vm627, %v679, %v692
      %v694 = vsel %vm629, %v679, %v693
      %v695 = vsel %vm619, %v688, %v688
      %v696 = vsel %vm621, %v688, %v695
      %v697 = vsel %vm623, %v688, %v696
      %v698 = vsel %vm625, %v688, %v697
      %v699 = vsel %vm627, %v688, %v698
      %v700 = vsel %vm629, %v688, %v699
      %v703 = vmul.f32 %v645, %v694
      %v704 = vmul.f32 %v649, %v694
      %v705 = vmul.f32 %v653, %v700
      %v706 = vmul.f32 %v657, %v700
      %v707 = vadd.f32 %v639, %v703
      %v708 = vadd.f32 %v640, %v704
      %v709 = vadd.f32 %v641, %v705
      %v710 = vadd.f32 %v642, %v706
      %v711 = vlaneseq
      %v712 = vshrl.u32 %v711, 7
      %v713 = vsub.s32 0, %v712
      %v714 = vrot.slane %v564, %v713
      %v715 = vadd.f32 %v540, %v714
      %v716 = vadd.f32 %v541, %v714
      %v717 = vadd.f32 %v542, %v714
      %v718 = vadd.f32 %v543, %v714
      %720 = vset.pattern.permute.xlu0 0
      %721 = vperm.xlu0 %720, %v715
      %v722 = vpop.permute.xlu0 %721
      %725 = vset.pattern.permute.xlu0 0
      %726 = vperm.xlu0 %725, %v716
      %v727 = vpop.permute.xlu0 %726
      %730 = vset.pattern.permute.xlu0 0
      %731 = vperm.xlu0 %730, %v717
      %v732 = vpop.permute.xlu0 %731
      %735 = vset.pattern.permute.xlu0 0
      %736 = vperm.xlu0 %735, %v718
      %v737 = vpop.permute.xlu0 %736
      %v739 = vmul.f32 %v722, %v557
      %v740 = vmul.f32 %v727, %v558
      %v741 = vmul.f32 %v732, %v557
      %v742 = vmul.f32 %v737, %v558
      %v743 = vadd.f32 %v707, %v739
      %v744 = vadd.f32 %v708, %v740
      %v745 = vadd.f32 %v709, %v741
      %v746 = vadd.f32 %v710, %v742
      %747 = vset.pattern.permute.xlu0 1
      %748 = vperm.xlu0 %747, %v715
      %v749 = vpop.permute.xlu0 %748
      %751 = vset.pattern.permute.xlu0 1
      %752 = vperm.xlu0 %751, %v716
      %v753 = vpop.permute.xlu0 %752
      %755 = vset.pattern.permute.xlu0 1
      %756 = vperm.xlu0 %755, %v717
      %v757 = vpop.permute.xlu0 %756
      %759 = vset.pattern.permute.xlu0 1
      %760 = vperm.xlu0 %759, %v718
      %v761 = vpop.permute.xlu0 %760
      %v763 = vmul.f32 %v749, %v560
      %v764 = vmul.f32 %v753, %v561
      %v765 = vmul.f32 %v757, %v560
      %v766 = vmul.f32 %v761, %v561
      %v767 = vadd.f32 %v743, %v763
      %v768 = vadd.f32 %v744, %v764
      %v769 = vadd.f32 %v745, %v765
      %v770 = vadd.f32 %v746, %v766
      %v775 = vlaneseq
      %v776 = vshrl.u32 %v775, 7
      %v777 = vsub.s32 0, %v776
      %v778 = vrot.slane %v562, %v777
      %v779 = vmul.f32 %v587, %v778
      %v780 = vmul.f32 %v590, %v778
      %v781 = vmul.f32 %v593, %v778
      %v782 = vmul.f32 %v596, %v778
      %v783 = vadd.f32 %v767, %v779
      %v784 = vadd.f32 %v768, %v780
      %v785 = vadd.f32 %v769, %v781
      %v786 = vadd.f32 %v770, %v782
      %v791 = vlaneseq
      %v792 = vshrl.u32 %v791, 7
      %v793 = vsub.s32 0, %v792
      %v794 = vrot.slane %v563, %v793
      %v795 = vmul.f32 %v661, %v794
      %v796 = vmul.f32 %v664, %v794
      %v797 = vmul.f32 %v667, %v794
      %v798 = vmul.f32 %v670, %v794
      %v799 = vadd.f32 %v783, %v795
      %v800 = vadd.f32 %v784, %v796
      %v801 = vadd.f32 %v785, %v797
      %v802 = vadd.f32 %v786, %v798
      %vm803 = vcmask 130048
      %v804 = vsel %vm803, %v799, -inf
      %805 = vmax.xlane.f32.xlu0 %v804
      %v806 = vpop.xlane.xlu0 %805
      %v807 = vsel %vm803, %v800, -inf
      %808 = vmax.xlane.f32.xlu0 %v807
      %v809 = vpop.xlane.xlu0 %808
      %v810 = vsel %vm803, %v801, -inf
      %811 = vmax.xlane.f32.xlu0 %v810
      %v812 = vpop.xlane.xlu0 %811
      %v813 = vsel %vm803, %v802, -inf
      %814 = vmax.xlane.f32.xlu0 %v813
      %v815 = vpop.xlane.xlu0 %814
      %v816 = vsub.f32 %v799, %v806
      %v817 = vsub.f32 %v800, %v809
      %v818 = vsub.f32 %v801, %v812
      %v819 = vsub.f32 %v802, %v815
      %v820 = vmul.f32 %v816, 1.442695
      %v821 = vpow.pop %v820
      %v822 = vmul.f32 %v817, 1.442695
      %v823 = vpow.pop %v822
      %v824 = vmul.f32 %v818, 1.442695
      %v825 = vpow.pop %v824
      %v826 = vmul.f32 %v819, 1.442695
      %v827 = vpow.pop %v826
      %v828 = vsel %vm803, %v821, 0.0
      %829 = vadd.xlane.f32.xlu0 %v828
      %v830 = vpop.xlane.xlu0 %829
      %v831 = vsel %vm803, %v823, 0.0
      %832 = vadd.xlane.f32.xlu0 %v831
      %v833 = vpop.xlane.xlu0 %832
      %v834 = vsel %vm803, %v825, 0.0
      %835 = vadd.xlane.f32.xlu0 %v834
      %v836 = vpop.xlane.xlu0 %835
      %v837 = vsel %vm803, %v827, 0.0
      %838 = vadd.xlane.f32.xlu0 %v837
      %v839 = vpop.xlane.xlu0 %838
      %v840 = vrcp.pop %v830
      %v841 = vmul.f32 %v821, %v840
      %v842 = vrcp.pop %v833
      %v843 = vmul.f32 %v823, %v842
      %v844 = vrcp.pop %v836
      %v845 = vmul.f32 %v825, %v844
      %v846 = vrcp.pop %v839
      %v847 = vmul.f32 %v827, %v846
      %848 = vset.pattern.permute.xlu0 2
      %849 = vperm.xlu0 %848, %v540
      %v850 = vpop.permute.xlu0 %849
      %852 = vset.pattern.permute.xlu0 2
      %853 = vperm.xlu0 %852, %v541
      %v854 = vpop.permute.xlu0 %853
      %856 = vset.pattern.permute.xlu0 2
      %857 = vperm.xlu0 %856, %v542
      %v858 = vpop.permute.xlu0 %857
      %860 = vset.pattern.permute.xlu0 2
      %861 = vperm.xlu0 %860, %v543
      %v862 = vpop.permute.xlu0 %861
      %864 = vset.pattern.permute.xlu0 6
      %865 = vperm.xlu0 %864, %v540
      %v866 = vpop.permute.xlu0 %865
      %867 = vset.pattern.permute.xlu0 6
      %868 = vperm.xlu0 %867, %v541
      %v869 = vpop.permute.xlu0 %868
      %870 = vset.pattern.permute.xlu0 6
      %871 = vperm.xlu0 %870, %v542
      %v872 = vpop.permute.xlu0 %871
      %873 = vset.pattern.permute.xlu0 6
      %874 = vperm.xlu0 %873, %v543
      %v875 = vpop.permute.xlu0 %874
      %v876 = vlaneseq
      %v877 = vshrl.u32 %v876, 7
      %v878 = vsub.s32 %v598, %v877
      %v879 = vrot.slane %v866, %v878
      %v880 = vlaneseq
      %v881 = vshrl.u32 %v880, 7
      %v882 = vsub.s32 %v603, %v881
      %v883 = vrot.slane %v869, %v882
      %v884 = vsel %vm608, %v883, %v879
      %v885 = vlaneseq
      %v886 = vshrl.u32 %v885, 7
      %v887 = vsub.s32 %v598, %v886
      %v888 = vrot.slane %v872, %v887
      %v889 = vlaneseq
      %v890 = vshrl.u32 %v889, 7
      %v891 = vsub.s32 %v603, %v890
      %v892 = vrot.slane %v875, %v891
      %v893 = vsel %vm608, %v892, %v888
      %v894 = vsel %vm619, %v884, %v884
      %v895 = vsel %vm621, %v884, %v894
      %v896 = vsel %vm623, %v884, %v895
      %v897 = vsel %vm625, %v884, %v896
      %v898 = vsel %vm627, %v884, %v897
      %v899 = vsel %vm629, %v884, %v898
      %v900 = vsel %vm619, %v893, %v893
      %v901 = vsel %vm621, %v893, %v900
      %v902 = vsel %vm623, %v893, %v901
      %v903 = vsel %vm625, %v893, %v902
      %v904 = vsel %vm627, %v893, %v903
      %v905 = vsel %vm629, %v893, %v904
      %v908 = vmul.f32 %v850, %v899
      %v909 = vmul.f32 %v854, %v899
      %v910 = vmul.f32 %v858, %v905
      %v911 = vmul.f32 %v862, %v905
      %912 = vset.pattern.permute.xlu0 3
      %913 = vperm.xlu0 %912, %v540
      %v914 = vpop.permute.xlu0 %913
      %916 = vset.pattern.permute.xlu0 3
      %917 = vperm.xlu0 %916, %v541
      %v918 = vpop.permute.xlu0 %917
      %920 = vset.pattern.permute.xlu0 3
      %921 = vperm.xlu0 %920, %v542
      %v922 = vpop.permute.xlu0 %921
      %924 = vset.pattern.permute.xlu0 3
      %925 = vperm.xlu0 %924, %v543
      %v926 = vpop.permute.xlu0 %925
      %928 = vset.pattern.permute.xlu0 7
      %929 = vperm.xlu0 %928, %v540
      %v930 = vpop.permute.xlu0 %929
      %931 = vset.pattern.permute.xlu0 7
      %932 = vperm.xlu0 %931, %v541
      %v933 = vpop.permute.xlu0 %932
      %934 = vset.pattern.permute.xlu0 7
      %935 = vperm.xlu0 %934, %v542
      %v936 = vpop.permute.xlu0 %935
      %937 = vset.pattern.permute.xlu0 7
      %938 = vperm.xlu0 %937, %v543
      %v939 = vpop.permute.xlu0 %938
      %v940 = vlaneseq
      %v941 = vshrl.u32 %v940, 7
      %v942 = vsub.s32 %v598, %v941
      %v943 = vrot.slane %v930, %v942
      %v944 = vlaneseq
      %v945 = vshrl.u32 %v944, 7
      %v946 = vsub.s32 %v603, %v945
      %v947 = vrot.slane %v933, %v946
      %v948 = vsel %vm608, %v947, %v943
      %v949 = vlaneseq
      %v950 = vshrl.u32 %v949, 7
      %v951 = vsub.s32 %v598, %v950
      %v952 = vrot.slane %v936, %v951
      %v953 = vlaneseq
      %v954 = vshrl.u32 %v953, 7
      %v955 = vsub.s32 %v603, %v954
      %v956 = vrot.slane %v939, %v955
      %v957 = vsel %vm608, %v956, %v952
      %v958 = vsel %vm619, %v948, %v948
      %v959 = vsel %vm621, %v948, %v958
      %v960 = vsel %vm623, %v948, %v959
      %v961 = vsel %vm625, %v948, %v960
      %v962 = vsel %vm627, %v948, %v961
      %v963 = vsel %vm629, %v948, %v962
      %v964 = vsel %vm619, %v957, %v957
      %v965 = vsel %vm621, %v957, %v964
      %v966 = vsel %vm623, %v957, %v965
      %v967 = vsel %vm625, %v957, %v966
      %v968 = vsel %vm627, %v957, %v967
      %v969 = vsel %vm629, %v957, %v968
      %v972 = vmul.f32 %v914, %v963
      %v973 = vmul.f32 %v918, %v963
      %v974 = vmul.f32 %v922, %v969
      %v975 = vmul.f32 %v926, %v969
      %v976 = vadd.f32 %v908, %v972
      %v977 = vadd.f32 %v909, %v973
      %v978 = vadd.f32 %v910, %v974
      %v979 = vadd.f32 %v911, %v975
      %v980 = vlaneseq
      %v981 = vshrl.u32 %v980, 7
      %v982 = vsub.s32 1, %v981
      %v983 = vrot.slane %v564, %v982
      %985 = vrot.lane.b32.xlu0 %v983, 2
      %v986 = vpop.permute.xlu0 %985
      %v988 = vadd.f32 %v540, %v986
      %v989 = vadd.f32 %v541, %v986
      %v990 = vadd.f32 %v542, %v986
      %v991 = vadd.f32 %v543, %v986
      %993 = vset.pattern.permute.xlu0 2
      %994 = vperm.xlu0 %993, %v988
      %v995 = vpop.permute.xlu0 %994
      %998 = vset.pattern.permute.xlu0 2
      %999 = vperm.xlu0 %998, %v989
      %v1000 = vpop.permute.xlu0 %999
      %1003 = vset.pattern.permute.xlu0 2
      %1004 = vperm.xlu0 %1003, %v990
      %v1005 = vpop.permute.xlu0 %1004
      %1008 = vset.pattern.permute.xlu0 2
      %1009 = vperm.xlu0 %1008, %v991
      %v1010 = vpop.permute.xlu0 %1009
      %v1012 = vmul.f32 %v995, %v557
      %v1013 = vmul.f32 %v1000, %v558
      %v1014 = vmul.f32 %v1005, %v557
      %v1015 = vmul.f32 %v1010, %v558
      %v1016 = vadd.f32 %v976, %v1012
      %v1017 = vadd.f32 %v977, %v1013
      %v1018 = vadd.f32 %v978, %v1014
      %v1019 = vadd.f32 %v979, %v1015
      %1020 = vset.pattern.permute.xlu0 3
      %1021 = vperm.xlu0 %1020, %v988
      %v1022 = vpop.permute.xlu0 %1021
      %1024 = vset.pattern.permute.xlu0 3
      %1025 = vperm.xlu0 %1024, %v989
      %v1026 = vpop.permute.xlu0 %1025
      %1028 = vset.pattern.permute.xlu0 3
      %1029 = vperm.xlu0 %1028, %v990
      %v1030 = vpop.permute.xlu0 %1029
      %1032 = vset.pattern.permute.xlu0 3
      %1033 = vperm.xlu0 %1032, %v991
      %v1034 = vpop.permute.xlu0 %1033
      %v1036 = vmul.f32 %v1022, %v560
      %v1037 = vmul.f32 %v1026, %v561
      %v1038 = vmul.f32 %v1030, %v560
      %v1039 = vmul.f32 %v1034, %v561
      %v1040 = vadd.f32 %v1016, %v1036
      %v1041 = vadd.f32 %v1017, %v1037
      %v1042 = vadd.f32 %v1018, %v1038
      %v1043 = vadd.f32 %v1019, %v1039
      %v1048 = vmul.f32 %v866, %v778
      %v1049 = vmul.f32 %v869, %v778
      %v1050 = vmul.f32 %v872, %v778
      %v1051 = vmul.f32 %v875, %v778
      %v1052 = vadd.f32 %v1040, %v1048
      %v1053 = vadd.f32 %v1041, %v1049
      %v1054 = vadd.f32 %v1042, %v1050
      %v1055 = vadd.f32 %v1043, %v1051
      %v1060 = vmul.f32 %v930, %v794
      %v1061 = vmul.f32 %v933, %v794
      %v1062 = vmul.f32 %v936, %v794
      %v1063 = vmul.f32 %v939, %v794
      %v1064 = vadd.f32 %v1052, %v1060
      %v1065 = vadd.f32 %v1053, %v1061
      %v1066 = vadd.f32 %v1054, %v1062
      %v1067 = vadd.f32 %v1055, %v1063
      %v1068 = vsel %vm803, %v1064, -inf
      %1069 = vmax.xlane.f32.xlu0 %v1068
      %v1070 = vpop.xlane.xlu0 %1069
      %v1071 = vsel %vm803, %v1065, -inf
      %1072 = vmax.xlane.f32.xlu0 %v1071
      %v1073 = vpop.xlane.xlu0 %1072
      %v1074 = vsel %vm803, %v1066, -inf
      %1075 = vmax.xlane.f32.xlu0 %v1074
      %v1076 = vpop.xlane.xlu0 %1075
      %v1077 = vsel %vm803, %v1067, -inf
      %1078 = vmax.xlane.f32.xlu0 %v1077
      %v1079 = vpop.xlane.xlu0 %1078
      %v1080 = vsub.f32 %v1064, %v1070
      %v1081 = vsub.f32 %v1065, %v1073
      %v1082 = vsub.f32 %v1066, %v1076
      %v1083 = vsub.f32 %v1067, %v1079
      %v1084 = vmul.f32 %v1080, 1.442695
      %v1085 = vpow.pop %v1084
      %v1086 = vmul.f32 %v1081, 1.442695
      %v1087 = vpow.pop %v1086
      %v1088 = vmul.f32 %v1082, 1.442695
      %v1089 = vpow.pop %v1088
      %v1090 = vmul.f32 %v1083, 1.442695
      %v1091 = vpow.pop %v1090
      %v1092 = vsel %vm803, %v1085, 0.0
      %1093 = vadd.xlane.f32.xlu0 %v1092
      %v1094 = vpop.xlane.xlu0 %1093
      %v1095 = vsel %vm803, %v1087, 0.0
      %1096 = vadd.xlane.f32.xlu0 %v1095
      %v1097 = vpop.xlane.xlu0 %1096
      %v1098 = vsel %vm803, %v1089, 0.0
      %1099 = vadd.xlane.f32.xlu0 %v1098
      %v1100 = vpop.xlane.xlu0 %1099
      %v1101 = vsel %vm803, %v1091, 0.0
      %1102 = vadd.xlane.f32.xlu0 %v1101
      %v1103 = vpop.xlane.xlu0 %1102
      %v1104 = vrcp.pop %v1094
      %v1105 = vmul.f32 %v1085, %v1104
      %v1106 = vrcp.pop %v1097
      %v1107 = vmul.f32 %v1087, %v1106
      %v1108 = vrcp.pop %v1100
      %v1109 = vmul.f32 %v1089, %v1108
      %v1110 = vrcp.pop %v1103
      %v1111 = vmul.f32 %v1091, %v1110
      %1114 = vrot.lane.b32.xlu0 %v553, 120
      %v1115 = vpop.permute.xlu0 %1114
      %1116 = vrot.lane.b32.xlu0 %v554, 120
      %v1117 = vpop.permute.xlu0 %1116
      %v1121 = vsel %vm803, %v1105, 0
      %v1124 = vsel %vm803, %v1107, 0
      %1126 = vmatprep.subr.mxu0 0.0
      %1127 = vmatpush1.msra.mxu0 0.0
      %1128 = vmatprep.subr.mxu0 0.0
      %1129 = vmatpush1.msra.mxu0 0.0
      %1130 = vmatprep.subr.mxu0 0.0
      %1131 = vmatpush1.msra.mxu0 0.0
      %1132 = vmatprep.subr.mxu0 0.0
      %1133 = vmatpush1.msra.mxu0 0.0
      %1134 = vmatprep.subr.mxu0 0.0
      %1135 = vmatpush1.msra.mxu0 0.0
      %1136 = vmatprep.subr.mxu0 0.0
      %1137 = vmatpush1.msra.mxu0 0.0
      %1138 = vmatprep.subr.mxu0 0.0
      %1139 = vmatpush1.msra.mxu0 0.0
      %1140 = vmatprep.subr.mxu0 0.0
      %1141 = vmatpush1.msra.mxu0 0.0
      %1142 = vmatprep.subr.mxu0 0.0
      %1143 = vmatpush1.msra.mxu0 0.0
      %1144 = vmatprep.subr.mxu0 0.0
      %1145 = vmatpush1.msra.mxu0 0.0
      %1146 = vmatprep.subr.mxu0 0.0
      %1147 = vmatpush1.msra.mxu0 0.0
      %1148 = vmatprep.subr.mxu0 0.0
      %1149 = vmatpush1.msra.mxu0 0.0
      %1150 = vmatprep.subr.mxu0 0.0
      %1151 = vmatpush1.msra.mxu0 0.0
      %1152 = vmatprep.subr.mxu0 0.0
      %1153 = vmatpush1.msra.mxu0 0.0
      %1154 = vmatprep.subr.mxu0 0.0
      %1155 = vmatpush1.msra.mxu0 %v1117
      %1156 = vmatprep.subr.mxu0 0.0
      %1157 = vmatpush1.msra.mxu0 %v1115
      %1158 = vmatprep.subr.mxu0 0.0
      %1159 = vmatpush2.msra.mxu0 0.0
      %1160 = vmatprep.subr.mxu0 0.0
      %1161 = vmatpush2.msra.mxu0 0.0
      %1162 = vmatprep.subr.mxu0 0.0
      %1163 = vmatpush2.msra.mxu0 0.0
      %1164 = vmatprep.subr.mxu0 0.0
      %1165 = vmatpush2.msra.mxu0 0.0
      %1166 = vmatprep.subr.mxu0 0.0
      %1167 = vmatpush2.msra.mxu0 0.0
      %1168 = vmatprep.subr.mxu0 0.0
      %1169 = vmatpush2.msra.mxu0 0.0
      %1170 = vmatprep.subr.mxu0 0.0
      %1171 = vmatpush2.msra.mxu0 0.0
      %1172 = vmatprep.subr.mxu0 0.0
      %1173 = vmatpush2.msra.mxu0 0.0
      %1174 = vmatprep.subr.mxu0 0.0
      %1175 = vmatpush2.msra.mxu0 0.0
      %1176 = vmatprep.subr.mxu0 0.0
      %1177 = vmatpush2.msra.mxu0 0.0
      %1178 = vmatprep.subr.mxu0 0.0
      %1179 = vmatpush2.msra.mxu0 0.0
      %1180 = vmatprep.subr.mxu0 0.0
      %1181 = vmatpush2.msra.mxu0 0.0
      %1182 = vmatprep.subr.mxu0 0.0
      %1183 = vmatpush2.msra.mxu0 0.0
      %1184 = vmatprep.subr.mxu0 0.0
      %1185 = vmatpush2.msra.mxu0 0.0
      %1186 = vmatprep.subr.mxu0 0.0
      %1187 = vmatpush2.msra.mxu0 0.0
      %1188 = vmatprep.subr.mxu0 0.0
      %1189 = vmatpush2.msra.mxu0 0.0
      %1190 = vmatprep.mubr.f32.mxu0 0.0
      %1191 = vmatmul.mubr.f32.gmra.mxu0 %v1121
      %v1192 = vpop.f32.mrf.mxu0
      %v1193 = vadd.f32 0.0, %v1192
      %v1194 = vpop.f32.mrf.mxu0
      %1195 = vmatprep.mubr.f32.mxu0 0.0
      %1196 = vmatmul.mubr.f32.gmra.mxu0 %v1124
      %v1197 = vpop.f32.mrf.mxu0
      %v1198 = vadd.f32 0.0, %v1197
      %v1199 = vpop.f32.mrf.mxu0
      %1200 = vdwg.mxu0
      %1203 = vrot.lane.b32.xlu0 %v555, 120
      %v1204 = vpop.permute.xlu0 %1203
      %1205 = vrot.lane.b32.xlu0 %v556, 120
      %v1206 = vpop.permute.xlu0 %1205
      %v1210 = vsel %vm803, %v1109, 0
      %v1213 = vsel %vm803, %v1111, 0
      %1215 = vmatprep.subr.mxu0 0.0
      %1216 = vmatpush1.msra.mxu0 0.0
      %1217 = vmatprep.subr.mxu0 0.0
      %1218 = vmatpush1.msra.mxu0 0.0
      %1219 = vmatprep.subr.mxu0 0.0
      %1220 = vmatpush1.msra.mxu0 0.0
      %1221 = vmatprep.subr.mxu0 0.0
      %1222 = vmatpush1.msra.mxu0 0.0
      %1223 = vmatprep.subr.mxu0 0.0
      %1224 = vmatpush1.msra.mxu0 0.0
      %1225 = vmatprep.subr.mxu0 0.0
      %1226 = vmatpush1.msra.mxu0 0.0
      %1227 = vmatprep.subr.mxu0 0.0
      %1228 = vmatpush1.msra.mxu0 0.0
      %1229 = vmatprep.subr.mxu0 0.0
      %1230 = vmatpush1.msra.mxu0 0.0
      %1231 = vmatprep.subr.mxu0 0.0
      %1232 = vmatpush1.msra.mxu0 0.0
      %1233 = vmatprep.subr.mxu0 0.0
      %1234 = vmatpush1.msra.mxu0 0.0
      %1235 = vmatprep.subr.mxu0 0.0
      %1236 = vmatpush1.msra.mxu0 0.0
      %1237 = vmatprep.subr.mxu0 0.0
      %1238 = vmatpush1.msra.mxu0 0.0
      %1239 = vmatprep.subr.mxu0 0.0
      %1240 = vmatpush1.msra.mxu0 0.0
      %1241 = vmatprep.subr.mxu0 0.0
      %1242 = vmatpush1.msra.mxu0 0.0
      %1243 = vmatprep.subr.mxu0 0.0
      %1244 = vmatpush1.msra.mxu0 %v1206
      %1245 = vmatprep.subr.mxu0 0.0
      %1246 = vmatpush1.msra.mxu0 %v1204
      %1247 = vmatprep.subr.mxu0 0.0
      %1248 = vmatpush2.msra.mxu0 0.0
      %1249 = vmatprep.subr.mxu0 0.0
      %1250 = vmatpush2.msra.mxu0 0.0
      %1251 = vmatprep.subr.mxu0 0.0
      %1252 = vmatpush2.msra.mxu0 0.0
      %1253 = vmatprep.subr.mxu0 0.0
      %1254 = vmatpush2.msra.mxu0 0.0
      %1255 = vmatprep.subr.mxu0 0.0
      %1256 = vmatpush2.msra.mxu0 0.0
      %1257 = vmatprep.subr.mxu0 0.0
      %1258 = vmatpush2.msra.mxu0 0.0
      %1259 = vmatprep.subr.mxu0 0.0
      %1260 = vmatpush2.msra.mxu0 0.0
      %1261 = vmatprep.subr.mxu0 0.0
      %1262 = vmatpush2.msra.mxu0 0.0
      %1263 = vmatprep.subr.mxu0 0.0
      %1264 = vmatpush2.msra.mxu0 0.0
      %1265 = vmatprep.subr.mxu0 0.0
      %1266 = vmatpush2.msra.mxu0 0.0
      %1267 = vmatprep.subr.mxu0 0.0
      %1268 = vmatpush2.msra.mxu0 0.0
      %1269 = vmatprep.subr.mxu0 0.0
      %1270 = vmatpush2.msra.mxu0 0.0
      %1271 = vmatprep.subr.mxu0 0.0
      %1272 = vmatpush2.msra.mxu0 0.0
      %1273 = vmatprep.subr.mxu0 0.0
      %1274 = vmatpush2.msra.mxu0 0.0
      %1275 = vmatprep.subr.mxu0 0.0
      %1276 = vmatpush2.msra.mxu0 0.0
      %1277 = vmatprep.subr.mxu0 0.0
      %1278 = vmatpush2.msra.mxu0 0.0
      %1279 = vmatprep.mubr.f32.mxu0 0.0
      %1280 = vmatmul.mubr.f32.gmra.mxu0 %v1210
      %v1281 = vpop.f32.mrf.mxu0
      %v1282 = vadd.f32 0.0, %v1281
      %v1283 = vpop.f32.mrf.mxu0
      %1284 = vmatprep.mubr.f32.mxu0 0.0
      %1285 = vmatmul.mubr.f32.gmra.mxu0 %v1213
      %v1286 = vpop.f32.mrf.mxu0
      %v1287 = vadd.f32 0.0, %v1286
      %v1288 = vpop.f32.mrf.mxu0
      %1289 = vdwg.mxu0
      %v1291 = vsel %vm803, %v841, 0
      %v1294 = vsel %vm803, %v843, 0
      %1296 = vmatprep.subr.mxu0 0.0
      %1297 = vmatpush1.msra.mxu0 0.0
      %1298 = vmatprep.subr.mxu0 0.0
      %1299 = vmatpush1.msra.mxu0 0.0
      %1300 = vmatprep.subr.mxu0 0.0
      %1301 = vmatpush1.msra.mxu0 0.0
      %1302 = vmatprep.subr.mxu0 0.0
      %1303 = vmatpush1.msra.mxu0 0.0
      %1304 = vmatprep.subr.mxu0 0.0
      %1305 = vmatpush1.msra.mxu0 0.0
      %1306 = vmatprep.subr.mxu0 0.0
      %1307 = vmatpush1.msra.mxu0 0.0
      %1308 = vmatprep.subr.mxu0 0.0
      %1309 = vmatpush1.msra.mxu0 0.0
      %1310 = vmatprep.subr.mxu0 0.0
      %1311 = vmatpush1.msra.mxu0 0.0
      %1312 = vmatprep.subr.mxu0 0.0
      %1313 = vmatpush1.msra.mxu0 0.0
      %1314 = vmatprep.subr.mxu0 0.0
      %1315 = vmatpush1.msra.mxu0 0.0
      %1316 = vmatprep.subr.mxu0 0.0
      %1317 = vmatpush1.msra.mxu0 0.0
      %1318 = vmatprep.subr.mxu0 0.0
      %1319 = vmatpush1.msra.mxu0 0.0
      %1320 = vmatprep.subr.mxu0 0.0
      %1321 = vmatpush1.msra.mxu0 0.0
      %1322 = vmatprep.subr.mxu0 0.0
      %1323 = vmatpush1.msra.mxu0 0.0
      %1324 = vmatprep.subr.mxu0 0.0
      %1325 = vmatpush1.msra.mxu0 %v554
      %1326 = vmatprep.subr.mxu0 0.0
      %1327 = vmatpush1.msra.mxu0 %v553
      %1328 = vmatprep.subr.mxu0 0.0
      %1329 = vmatpush2.msra.mxu0 0.0
      %1330 = vmatprep.subr.mxu0 0.0
      %1331 = vmatpush2.msra.mxu0 0.0
      %1332 = vmatprep.subr.mxu0 0.0
      %1333 = vmatpush2.msra.mxu0 0.0
      %1334 = vmatprep.subr.mxu0 0.0
      %1335 = vmatpush2.msra.mxu0 0.0
      %1336 = vmatprep.subr.mxu0 0.0
      %1337 = vmatpush2.msra.mxu0 0.0
      %1338 = vmatprep.subr.mxu0 0.0
      %1339 = vmatpush2.msra.mxu0 0.0
      %1340 = vmatprep.subr.mxu0 0.0
      %1341 = vmatpush2.msra.mxu0 0.0
      %1342 = vmatprep.subr.mxu0 0.0
      %1343 = vmatpush2.msra.mxu0 0.0
      %1344 = vmatprep.subr.mxu0 0.0
      %1345 = vmatpush2.msra.mxu0 0.0
      %1346 = vmatprep.subr.mxu0 0.0
      %1347 = vmatpush2.msra.mxu0 0.0
      %1348 = vmatprep.subr.mxu0 0.0
      %1349 = vmatpush2.msra.mxu0 0.0
      %1350 = vmatprep.subr.mxu0 0.0
      %1351 = vmatpush2.msra.mxu0 0.0
      %1352 = vmatprep.subr.mxu0 0.0
      %1353 = vmatpush2.msra.mxu0 0.0
      %1354 = vmatprep.subr.mxu0 0.0
      %1355 = vmatpush2.msra.mxu0 0.0
      %1356 = vmatprep.subr.mxu0 0.0
      %1357 = vmatpush2.msra.mxu0 0.0
      %1358 = vmatprep.subr.mxu0 0.0
      %1359 = vmatpush2.msra.mxu0 0.0
      %1360 = vmatprep.mubr.f32.mxu0 0.0
      %1361 = vmatmul.mubr.f32.gmra.mxu0 %v1291
      %v1362 = vpop.f32.mrf.mxu0
      %v1363 = vadd.f32 %v1193, %v1362
      %v1364 = vpop.f32.mrf.mxu0
      %1365 = vmatprep.mubr.f32.mxu0 0.0
      %1366 = vmatmul.mubr.f32.gmra.mxu0 %v1294
      %v1367 = vpop.f32.mrf.mxu0
      %v1368 = vadd.f32 %v1198, %v1367
      %v1369 = vpop.f32.mrf.mxu0
      %1370 = vdwg.mxu0
      %v1372 = vsel %vm803, %v845, 0
      %v1375 = vsel %vm803, %v847, 0
      %1377 = vmatprep.subr.mxu0 0.0
      %1378 = vmatpush1.msra.mxu0 0.0
      %1379 = vmatprep.subr.mxu0 0.0
      %1380 = vmatpush1.msra.mxu0 0.0
      %1381 = vmatprep.subr.mxu0 0.0
      %1382 = vmatpush1.msra.mxu0 0.0
      %1383 = vmatprep.subr.mxu0 0.0
      %1384 = vmatpush1.msra.mxu0 0.0
      %1385 = vmatprep.subr.mxu0 0.0
      %1386 = vmatpush1.msra.mxu0 0.0
      %1387 = vmatprep.subr.mxu0 0.0
      %1388 = vmatpush1.msra.mxu0 0.0
      %1389 = vmatprep.subr.mxu0 0.0
      %1390 = vmatpush1.msra.mxu0 0.0
      %1391 = vmatprep.subr.mxu0 0.0
      %1392 = vmatpush1.msra.mxu0 0.0
      %1393 = vmatprep.subr.mxu0 0.0
      %1394 = vmatpush1.msra.mxu0 0.0
      %1395 = vmatprep.subr.mxu0 0.0
      %1396 = vmatpush1.msra.mxu0 0.0
      %1397 = vmatprep.subr.mxu0 0.0
      %1398 = vmatpush1.msra.mxu0 0.0
      %1399 = vmatprep.subr.mxu0 0.0
      %1400 = vmatpush1.msra.mxu0 0.0
      %1401 = vmatprep.subr.mxu0 0.0
      %1402 = vmatpush1.msra.mxu0 0.0
      %1403 = vmatprep.subr.mxu0 0.0
      %1404 = vmatpush1.msra.mxu0 0.0
      %1405 = vmatprep.subr.mxu0 0.0
      %1406 = vmatpush1.msra.mxu0 %v556
      %1407 = vmatprep.subr.mxu0 0.0
      %1408 = vmatpush1.msra.mxu0 %v555
      %1409 = vmatprep.subr.mxu0 0.0
      %1410 = vmatpush2.msra.mxu0 0.0
      %1411 = vmatprep.subr.mxu0 0.0
      %1412 = vmatpush2.msra.mxu0 0.0
      %1413 = vmatprep.subr.mxu0 0.0
      %1414 = vmatpush2.msra.mxu0 0.0
      %1415 = vmatprep.subr.mxu0 0.0
      %1416 = vmatpush2.msra.mxu0 0.0
      %1417 = vmatprep.subr.mxu0 0.0
      %1418 = vmatpush2.msra.mxu0 0.0
      %1419 = vmatprep.subr.mxu0 0.0
      %1420 = vmatpush2.msra.mxu0 0.0
      %1421 = vmatprep.subr.mxu0 0.0
      %1422 = vmatpush2.msra.mxu0 0.0
      %1423 = vmatprep.subr.mxu0 0.0
      %1424 = vmatpush2.msra.mxu0 0.0
      %1425 = vmatprep.subr.mxu0 0.0
      %1426 = vmatpush2.msra.mxu0 0.0
      %1427 = vmatprep.subr.mxu0 0.0
      %1428 = vmatpush2.msra.mxu0 0.0
      %1429 = vmatprep.subr.mxu0 0.0
      %1430 = vmatpush2.msra.mxu0 0.0
      %1431 = vmatprep.subr.mxu0 0.0
      %1432 = vmatpush2.msra.mxu0 0.0
      %1433 = vmatprep.subr.mxu0 0.0
      %1434 = vmatpush2.msra.mxu0 0.0
      %1435 = vmatprep.subr.mxu0 0.0
      %1436 = vmatpush2.msra.mxu0 0.0
      %1437 = vmatprep.subr.mxu0 0.0
      %1438 = vmatpush2.msra.mxu0 0.0
      %1439 = vmatprep.subr.mxu0 0.0
      %1440 = vmatpush2.msra.mxu0 0.0
      %1441 = vmatprep.mubr.f32.mxu0 0.0
      %1442 = vmatmul.mubr.f32.gmra.mxu0 %v1372
      %v1443 = vpop.f32.mrf.mxu0
      %v1444 = vadd.f32 %v1282, %v1443
      %v1445 = vpop.f32.mrf.mxu0
      %1446 = vmatprep.mubr.f32.mxu0 0.0
      %1447 = vmatmul.mubr.f32.gmra.mxu0 %v1375
      %v1448 = vpop.f32.mrf.mxu0
      %v1449 = vadd.f32 %v1287, %v1448
      %v1450 = vpop.f32.mrf.mxu0
      %1451 = vdwg.mxu0
      %v1452 = vld [vmem:[%s384] sm:$0xff]
      %v1453 = vld [vmem:[%s384 + $0x8] sm:$0xff]
      %v1454 = vadd.f32 %v1363, %v1452
      %v1455 = vadd.f32 %v1368, %v1453
      %v1456 = vadd.f32 %v1444, %v1452
      %v1457 = vadd.f32 %v1449, %v1453
      %vm1458 = vcmask 64512
      %1459 = vst.msk [vmem:[%s389] sm:$0xff] %vm1458, %v1454
      %1460 = vst.msk [vmem:[%s389 + $0x8] sm:$0xff] %vm1458, %v1455
      %1461 = vst.msk [vmem:[%s389 + $0x10] sm:$0xff] %vm1458, %v1456
      %1462 = vst.msk [vmem:[%s389 + $0x18] sm:$0xff] %vm1458, %v1457
      %p1463 = scmp.lt.s32.totalorder %s18, 3
      %s1464 = scalar_select %p1463, %s18, 3
      %s1465 = smul.addr %s1464, 4
      %s1466 = smul.addr %s1465, 8
      %s1467 = scalar_lea.vmem %s7, %s1466
      // Predicated region
      $region49: #{tpu_custom_call.1} parent=47 // pred_check
        %p1468 = pneg %p218
      $region50: #{tpu_custom_call.1} parent=47 // pred_check_branch
        %1470 = sbr.rel (%p1468) target = $region52
      $region51: #{tpu_custom_call.1} parent=47 // pred_region
        _
      $region52: #{tpu_custom_call.1} parent=47 // pred_fallthru
        _
    $region48: #{tpu_custom_call.1} parent=5 // pred_fallthru
      _
    %p1471 = scmp.le.s32.totalorder 2, %s13
    // Predicated region
    $region53: #{tpu_custom_call.1} parent=5 // pred_check
      %p1472 = pneg %p1471
    $region54: #{tpu_custom_call.1} parent=5 // pred_check_branch
      %1474 = sbr.rel (%p1472) target = $region56
    $region55: #{tpu_custom_call.1} parent=5 // pred_region
      %s1475 = ssub.s32 %s13, 2
      // Predicated region
      $region57: #{tpu_custom_call.1} parent=55 // pred_check
        %p1476 = pneg %p224
      $region58: #{tpu_custom_call.1} parent=55 // pred_check_branch
        %1478 = sbr.rel (%p1476) target = $region60
      $region59: #{tpu_custom_call.1} parent=55 // pred_region
        %p1479 = scmp.lt.s32.totalorder %s19, 3
        %s1480 = scalar_select %p1479, %s19, 3
        %s1481 = smul.addr %s1480, 4
        %s1482 = smul.addr %s1481, 8
        %s1483 = scalar_lea.vmem %s7, %s1482
      $region60: #{tpu_custom_call.1} parent=55 // pred_fallthru
        _
    $region56: #{tpu_custom_call.1} parent=5 // pred_fallthru
      _
  $region6: #{tpu_custom_call.1} parent=0 // loop_footer
    %s17 = sadd.s32 1, %s13
  $region7: #{tpu_custom_call.1} parent=0 // loop_footer_branch
    %12 = sbr.rel target = $region3
  $region8: #{tpu_custom_call.1} parent=0 // loop_exit
    _

</llo_original>
